<compile_context>
chip_gen: v7x
topology: tpu7x:2x2x1
jax: 0.10.0
libtpu: 0.0.40
codegen_flags: <defaults>
</compile_context>

<pallas_src>
import functools

import jax
import jax.numpy as jnp
from jax.experimental import pallas as pl
from jax.experimental.pallas import tpu as pltpu


def scaclc_kernel(
    # inputs
    x_ref,
    we1_ref, be1_ref, we2_ref, be2_ref,      # encoder MLP
    wzh_ref, bzh_ref,                        # fused [enc_mu | enc_var] head
    eps_ref, eps0_ref,                       # reparameterization noise
    wd1_ref, bd1_ref, wd2_ref, bd2_ref,      # decoder MLP
    wdh_ref, bdh_ref,                        # fused [dec_mean | dec_disp | dec_pi] head
    cmu_t_ref, c_sq_ref,                     # centers^T (Z, Kp) and ||mu_k||^2 (1, Kp)
    # outputs
    zq_ref,                                  # (tm, 2Z + Kp) = [z_mu | z_logvar | q_pad]
    mu_ref, disp_ref, pi_ref,                # (tm, D) each
    *, z_dim, n_clusters,
):
    x = x_ref[...]

    # ---- Encoder: Linear + ReLU stack ----
    h = jnp.maximum(
        jnp.dot(x, we1_ref[...], preferred_element_type=jnp.float32) + be1_ref[...], 0.0)
    h = jnp.maximum(
        jnp.dot(h, we2_ref[...], preferred_element_type=jnp.float32) + be2_ref[...], 0.0)

    # fused z heads: single matmul; columns [0:Z] = z_mu, [Z:2Z] = z_logvar
    zm = jnp.dot(h, wzh_ref[...], preferred_element_type=jnp.float32) + bzh_ref[...]
    z_mu = zm[:, :z_dim]
    z_logvar = zm[:, z_dim:2 * z_dim]

    # reparameterize (encoder is deterministic; z and z0 differ only by the draw)
    std = jnp.exp(0.5 * z_logvar)
    z = z_mu + eps_ref[...] * std
    z0 = z_mu + eps0_ref[...] * std

    # ---- Decoder: Linear + ReLU stack ----
    hd = jnp.maximum(
        jnp.dot(z, wd1_ref[...], preferred_element_type=jnp.float32) + bd1_ref[...], 0.0)
    hd = jnp.maximum(
        jnp.dot(hd, wd2_ref[...], preferred_element_type=jnp.float32) + bd2_ref[...], 0.0)

    # fused decoder heads: one (D2, 3D) matmul; 256-wide chunks are lane-aligned
    heads = jnp.dot(hd, wdh_ref[...], preferred_element_type=jnp.float32) + bdh_ref[...]
    d_out = mu_ref.shape[1]
    mu_lin = heads[:, 0 * d_out:1 * d_out]
    disp_lin = heads[:, 1 * d_out:2 * d_out]
    pi_lin = heads[:, 2 * d_out:3 * d_out]

    # dec_mean : MeanAct = clamp(exp(x), 1e-5, 1e6)
    mu_ref[...] = jnp.clip(jnp.exp(mu_lin), 1e-5, 1e6)
    # dec_disp : DispAct = clamp(softplus(x), 1e-4, 1e4)
    # single-exp stable softplus: max(x, 0) + log1p(exp(-|x|))
    sp = jnp.maximum(disp_lin, 0.0) + jnp.log1p(jnp.exp(-jnp.abs(disp_lin)))
    disp_ref[...] = jnp.clip(sp, 1e-4, 1e4)
    # dec_pi : Sigmoid
    pi_ref[...] = jax.nn.sigmoid(pi_lin)

    # ---- soft_assign(z0): q_nk = 1/(1 + ||z0_n - mu_k||^2), row-normalized ----
    # Expanded form so the heavy term hits the MXU; centers arrive pre-transposed
    # and with precomputed squared norms (padded columns are masked to 0 below).
    z0_sq = jnp.sum(z0 * z0, axis=1, keepdims=True)                          # (tm, 1)
    cross = jnp.dot(z0, cmu_t_ref[...], preferred_element_type=jnp.float32)  # (tm, Kp)
    d = jnp.maximum(z0_sq + c_sq_ref[...] - 2.0 * cross, 0.0)
    col = jax.lax.broadcasted_iota(jnp.int32, d.shape, 1)
    q = jnp.where(col < n_clusters, 1.0 / (1.0 + d), 0.0)
    q = q / jnp.sum(q, axis=1, keepdims=True)

    # lane-dense packed output slab: [z_mu | z_logvar | q_pad], width = 2Z + Kp
    zq_ref[...] = jnp.concatenate([zm, q], axis=1)


def scaclc_forward(x, params, eps, eps0, *, tm=128):
    B, D = x.shape
    E1 = params["we1"].shape[1]
    E2 = params["we2"].shape[1]
    Z = params["wmu"].shape[1]
    K = params["cmu"].shape[0]
    D1 = params["wd1"].shape[1]
    D2 = params["wd2"].shape[1]

    # --- constant layout plumbing hoisted out of the kernel (free per call) ---
    wzh = jnp.concatenate([params["wmu"], params["wvar"]], axis=1)      # (E2, 2Z)
    bzh = jnp.concatenate([params["bmu"], params["bvar"]], axis=1)      # (1, 2Z)
    wdh = jnp.concatenate([params["wm"], params["wdsp"], params["wpi"]], axis=1)  # (D2, 3D)
    bdh = jnp.concatenate([params["bm"], params["bdsp"], params["bpi"]], axis=1)  # (1, 3D)

    slab = 128 * pl.cdiv(2 * Z + K, 128)    # lane-dense packed output width
    Kp = slab - 2 * Z                       # padded cluster count
    cmu_t = jnp.pad(params["cmu"].T, ((0, 0), (0, Kp - K)))             # (Z, Kp)
    c_sq = jnp.pad(jnp.sum(params["cmu"] ** 2, axis=1)[None, :],
                   ((0, 0), (0, Kp - K)))                               # (1, Kp)

    # --- batch tiling: row tile tm; weights stay resident across grid steps ---
    if B <= tm:
        tm = B                               # single full-extent block (always legal)
    Bp = pl.cdiv(B, tm) * tm
    if Bp != B:
        pad = ((0, Bp - B), (0, 0))
        x = jnp.pad(x, pad)
        eps = jnp.pad(eps, pad)
        eps0 = jnp.pad(eps0, pad)
    grid = (Bp // tm,)

    def tiled(width):
        return pl.BlockSpec((tm, width), lambda i: (i, 0))

    def resident(arr):                       # constant index_map -> no re-DMA per step
        return pl.BlockSpec(arr.shape, lambda i: (0, 0))

    inputs = [
        x,
        params["we1"], params["be1"], params["we2"], params["be2"],
        wzh, bzh,
        eps, eps0,
        params["wd1"], params["bd1"], params["wd2"], params["bd2"],
        wdh, bdh,
        cmu_t, c_sq,
    ]
    in_specs = [
        tiled(D),
        resident(params["we1"]), resident(params["be1"]),
        resident(params["we2"]), resident(params["be2"]),
        resident(wzh), resident(bzh),
        tiled(Z), tiled(Z),
        resident(params["wd1"]), resident(params["bd1"]),
        resident(params["wd2"]), resident(params["bd2"]),
        resident(wdh), resident(bdh),
        resident(cmu_t), resident(c_sq),
    ]

    out_shapes = (
        jax.ShapeDtypeStruct((Bp, slab), jnp.float32),   # [z_mu | z_logvar | q_pad]
        jax.ShapeDtypeStruct((Bp, D), jnp.float32),      # mu   (MeanAct)
        jax.ShapeDtypeStruct((Bp, D), jnp.float32),      # disp (DispAct)
        jax.ShapeDtypeStruct((Bp, D), jnp.float32),      # pi   (Sigmoid)
    )
    out_specs = (tiled(slab), tiled(D), tiled(D), tiled(D))

    # advisory cost estimate so XLA can overlap surrounding ops with this kernel
    flops = 2 * Bp * (D * E1 + E1 * E2 + E2 * 2 * Z + Z * D1 + D1 * D2
                      + D2 * 3 * D + Z * Kp)
    transcendentals = Bp * (Z + 4 * D + Kp)
    bytes_accessed = 4 * (sum(int(a.size) for a in inputs) + Bp * (slab + 3 * D))
    cost = pl.CostEstimate(flops=int(flops),
                           transcendentals=int(transcendentals),
                           bytes_accessed=int(bytes_accessed))

    zq, mu, disp, pi = pl.pallas_call(
        functools.partial(scaclc_kernel, z_dim=Z, n_clusters=K),
        grid=grid,
        in_specs=in_specs,
        out_specs=out_specs,
        out_shape=out_shapes,
        compiler_params=pltpu.CompilerParams(
            dimension_semantics=("parallel",)),   # batch axis -> both TCs on v7x
        cost_estimate=cost,
    )(*inputs)

    z_mu = zq[:B, :Z]
    z_logvar = zq[:B, Z:2 * Z]
    q = zq[:B, 2 * Z:2 * Z + K]
    return z_mu, z_logvar, mu[:B], disp[:B], pi[:B], q


# ----------------------------------------------------------------------------
# deterministic parameter construction (kaiming-normal-ish for MLP weights)
# ----------------------------------------------------------------------------
def make_params(key, input_dim, encode_layers, decode_layers, z_dim, n_clusters):
    def linear(key, fan_in, fan_out, kaiming=True):
        kw, _ = jax.random.split(key)
        std = (2.0 / fan_in) ** 0.5 if kaiming else (1.0 / fan_in) ** 0.5
        w = std * jax.random.normal(kw, (fan_in, fan_out), jnp.float32)
        b = jnp.zeros((1, fan_out), jnp.float32)
        return w, b

    keys = jax.random.split(key, 12)
    p = {}
    p["we1"], p["be1"] = linear(keys[0], input_dim, encode_layers[0])
    p["we2"], p["be2"] = linear(keys[1], encode_layers[0], encode_layers[1])
    p["wmu"], p["bmu"] = linear(keys[2], encode_layers[1], z_dim, kaiming=False)
    p["wvar"], p["bvar"] = linear(keys[3], encode_layers[1], z_dim, kaiming=False)
    p["wd1"], p["bd1"] = linear(keys[4], z_dim, decode_layers[0])
    p["wd2"], p["bd2"] = linear(keys[5], decode_layers[0], decode_layers[1])
    p["wm"], p["bm"] = linear(keys[6], decode_layers[1], input_dim, kaiming=False)
    p["wdsp"], p["bdsp"] = linear(keys[7], decode_layers[1], input_dim, kaiming=False)
    p["wpi"], p["bpi"] = linear(keys[8], decode_layers[1], input_dim, kaiming=False)
    p["cmu"] = jax.random.normal(keys[9], (n_clusters, z_dim), jnp.float32)
    return p


# pure-JAX reference of the same forward, for a correctness check
def reference_forward(x, p, eps, eps0):
    h = jax.nn.relu(x @ p["we1"] + p["be1"])
    h = jax.nn.relu(h @ p["we2"] + p["be2"])
    z_mu = h @ p["wmu"] + p["bmu"]
    z_logvar = h @ p["wvar"] + p["bvar"]
    std = jnp.exp(0.5 * z_logvar)
    z = z_mu + eps * std
    z0 = z_mu + eps0 * std
    hd = jax.nn.relu(z @ p["wd1"] + p["bd1"])
    hd = jax.nn.relu(hd @ p["wd2"] + p["bd2"])
    mu = jnp.clip(jnp.exp(hd @ p["wm"] + p["bm"]), 1e-5, 1e6)
    disp = jnp.clip(jax.nn.softplus(hd @ p["wdsp"] + p["bdsp"]), 1e-4, 1e4)
    pi = jax.nn.sigmoid(hd @ p["wpi"] + p["bpi"])
    d = jnp.sum((z0[:, None, :] - p["cmu"][None, :, :]) ** 2, axis=2)
    q = 1.0 / (1.0 + d)
    q = q / jnp.sum(q, axis=1, keepdims=True)
    return z_mu, z_logvar, mu, disp, pi, q


if __name__ == "__main__":
    # small shapes consistent with the module's forward
    input_dim = 256
    encode_layers = [128, 64]
    decode_layers = [64, 128]
    z_dim = 32
    n_clusters = 8
    batch = 8

    key = jax.random.PRNGKey(0)
    kx, keps, keps0, kparams = jax.random.split(key, 4)

    x = jax.random.normal(kx, (batch, input_dim), jnp.float32)
    eps = jax.random.normal(keps, (batch, z_dim), jnp.float32)
    eps0 = jax.random.normal(keps0, (batch, z_dim), jnp.float32)
    params = make_params(kparams, input_dim, encode_layers, decode_layers,
                         z_dim, n_clusters)

    outs = scaclc_forward(x, params, eps, eps0)
    outs = jax.block_until_ready(outs)

    refs = reference_forward(x, params, eps, eps0)
    for got, ref in zip(outs, refs):
        assert got.shape == ref.shape and got.dtype == ref.dtype
        assert jnp.allclose(got, ref, rtol=1e-4, atol=1e-4), "mismatch vs reference"

    print("KERNEL_OK")
</pallas_src>

<mosaic_0001>
module attributes {stable_mosaic.version = 11 : i64} {
  func.func @scaclc_kernel(%arg0: i32, %arg1: memref<8x256xf32, #tpu.memory_space<vmem>>, %arg2: memref<256x128xf32, #tpu.memory_space<vmem>>, %arg3: memref<1x128xf32, #tpu.memory_space<vmem>>, %arg4: memref<128x64xf32, #tpu.memory_space<vmem>>, %arg5: memref<1x64xf32, #tpu.memory_space<vmem>>, %arg6: memref<64x64xf32, #tpu.memory_space<vmem>>, %arg7: memref<1x64xf32, #tpu.memory_space<vmem>>, %arg8: memref<8x32xf32, #tpu.memory_space<vmem>>, %arg9: memref<8x32xf32, #tpu.memory_space<vmem>>, %arg10: memref<32x64xf32, #tpu.memory_space<vmem>>, %arg11: memref<1x64xf32, #tpu.memory_space<vmem>>, %arg12: memref<64x128xf32, #tpu.memory_space<vmem>>, %arg13: memref<1x128xf32, #tpu.memory_space<vmem>>, %arg14: memref<128x768xf32, #tpu.memory_space<vmem>>, %arg15: memref<1x768xf32, #tpu.memory_space<vmem>>, %arg16: memref<32x64xf32, #tpu.memory_space<vmem>>, %arg17: memref<1x64xf32, #tpu.memory_space<vmem>>, %arg18: memref<8x128xf32, #tpu.memory_space<vmem>>, %arg19: memref<8x256xf32, #tpu.memory_space<vmem>>, %arg20: memref<8x256xf32, #tpu.memory_space<vmem>>, %arg21: memref<8x256xf32, #tpu.memory_space<vmem>>) attributes {dimension_semantics = [#tpu.dimension_semantics<parallel>], iteration_bounds = array<i64: 1>, scalar_prefetch = 0 : i64, scratch_operands = 0 : i64, tpu.core_type = #tpu.core_type<tc>, window_params = [{transform_indices = @transform_0, window_bounds = array<i64: 8, 256>}, {pipeline_mode = #tpu.pipeline_mode<synchronous>, transform_indices = @transform_1, window_bounds = array<i64: 256, 128>}, {pipeline_mode = #tpu.pipeline_mode<synchronous>, transform_indices = @transform_2, window_bounds = array<i64: 1, 128>}, {pipeline_mode = #tpu.pipeline_mode<synchronous>, transform_indices = @transform_3, window_bounds = array<i64: 128, 64>}, {pipeline_mode = #tpu.pipeline_mode<synchronous>, transform_indices = @transform_4, window_bounds = array<i64: 1, 64>}, {pipeline_mode = #tpu.pipeline_mode<synchronous>, transform_indices = @transform_5, window_bounds = array<i64: 64, 64>}, {pipeline_mode = #tpu.pipeline_mode<synchronous>, transform_indices = @transform_6, window_bounds = array<i64: 1, 64>}, {transform_indices = @transform_7, window_bounds = array<i64: 8, 32>}, {transform_indices = @transform_8, window_bounds = array<i64: 8, 32>}, {pipeline_mode = #tpu.pipeline_mode<synchronous>, transform_indices = @transform_9, window_bounds = array<i64: 32, 64>}, {pipeline_mode = #tpu.pipeline_mode<synchronous>, transform_indices = @transform_10, window_bounds = array<i64: 1, 64>}, {pipeline_mode = #tpu.pipeline_mode<synchronous>, transform_indices = @transform_11, window_bounds = array<i64: 64, 128>}, {pipeline_mode = #tpu.pipeline_mode<synchronous>, transform_indices = @transform_12, window_bounds = array<i64: 1, 128>}, {pipeline_mode = #tpu.pipeline_mode<synchronous>, transform_indices = @transform_13, window_bounds = array<i64: 128, 768>}, {pipeline_mode = #tpu.pipeline_mode<synchronous>, transform_indices = @transform_14, window_bounds = array<i64: 1, 768>}, {pipeline_mode = #tpu.pipeline_mode<synchronous>, transform_indices = @transform_15, window_bounds = array<i64: 32, 64>}, {pipeline_mode = #tpu.pipeline_mode<synchronous>, transform_indices = @transform_16, window_bounds = array<i64: 1, 64>}, {transform_indices = @transform_17, window_bounds = array<i64: 8, 128>}, {transform_indices = @transform_18, window_bounds = array<i64: 8, 256>}, {transform_indices = @transform_19, window_bounds = array<i64: 8, 256>}, {transform_indices = @transform_20, window_bounds = array<i64: 8, 256>}]} {
    %c0 = arith.constant 0 : index
    %c0_0 = arith.constant 0 : index
    %0 = vector.load %arg1[%c0, %c0_0] : memref<8x256xf32, #tpu.memory_space<vmem>>, vector<8x256xf32>
    %c0_1 = arith.constant 0 : index
    %c0_2 = arith.constant 0 : index
    %1 = vector.load %arg2[%c0_1, %c0_2] : memref<256x128xf32, #tpu.memory_space<vmem>>, vector<256x128xf32>
    %cst = arith.constant dense<0.000000e+00> : vector<8x128xf32>
    %2 = tpu.matmul %0, %1, %cst {dimension_numbers = #tpu.dot_dimension_numbers<[1], [0], [0], [1], [0, 0, 1, 1], [], []>} : vector<8x256xf32>, vector<256x128xf32>, vector<8x128xf32> -> vector<8x128xf32>
    %c0_3 = arith.constant 0 : index
    %c0_4 = arith.constant 0 : index
    %3 = vector.load %arg3[%c0_3, %c0_4] : memref<1x128xf32, #tpu.memory_space<vmem>>, vector<1x128xf32>
    %4 = vector.broadcast %3 : vector<1x128xf32> to vector<8x128xf32>
    %5 = arith.addf %2, %4 : vector<8x128xf32>
    %cst_5 = arith.constant 0.000000e+00 : f32
    %6 = vector.broadcast %cst_5 : f32 to vector<8x128xf32>
    %7 = arith.maximumf %5, %6 : vector<8x128xf32>
    %c0_6 = arith.constant 0 : index
    %c0_7 = arith.constant 0 : index
    %8 = vector.load %arg4[%c0_6, %c0_7] : memref<128x64xf32, #tpu.memory_space<vmem>>, vector<128x64xf32>
    %cst_8 = arith.constant dense<0.000000e+00> : vector<8x64xf32>
    %9 = tpu.matmul %7, %8, %cst_8 {dimension_numbers = #tpu.dot_dimension_numbers<[1], [0], [0], [1], [0, 0, 1, 1], [], []>} : vector<8x128xf32>, vector<128x64xf32>, vector<8x64xf32> -> vector<8x64xf32>
    %c0_9 = arith.constant 0 : index
    %c0_10 = arith.constant 0 : index
    %10 = vector.load %arg5[%c0_9, %c0_10] : memref<1x64xf32, #tpu.memory_space<vmem>>, vector<1x64xf32>
    %11 = vector.broadcast %10 : vector<1x64xf32> to vector<8x64xf32>
    %12 = arith.addf %9, %11 : vector<8x64xf32>
    %cst_11 = arith.constant 0.000000e+00 : f32
    %13 = vector.broadcast %cst_11 : f32 to vector<8x64xf32>
    %14 = arith.maximumf %12, %13 : vector<8x64xf32>
    %c0_12 = arith.constant 0 : index
    %c0_13 = arith.constant 0 : index
    %15 = vector.load %arg6[%c0_12, %c0_13] : memref<64x64xf32, #tpu.memory_space<vmem>>, vector<64x64xf32>
    %cst_14 = arith.constant dense<0.000000e+00> : vector<8x64xf32>
    %16 = tpu.matmul %14, %15, %cst_14 {dimension_numbers = #tpu.dot_dimension_numbers<[1], [0], [0], [1], [0, 0, 1, 1], [], []>} : vector<8x64xf32>, vector<64x64xf32>, vector<8x64xf32> -> vector<8x64xf32>
    %c0_15 = arith.constant 0 : index
    %c0_16 = arith.constant 0 : index
    %17 = vector.load %arg7[%c0_15, %c0_16] : memref<1x64xf32, #tpu.memory_space<vmem>>, vector<1x64xf32>
    %18 = vector.broadcast %17 : vector<1x64xf32> to vector<8x64xf32>
    %19 = arith.addf %16, %18 : vector<8x64xf32>
    %20 = vector.extract_strided_slice %19 {offsets = [0, 0], sizes = [8, 32], strides = [1, 1]} : vector<8x64xf32> to vector<8x32xf32>
    %21 = vector.extract_strided_slice %19 {offsets = [0, 32], sizes = [8, 32], strides = [1, 1]} : vector<8x64xf32> to vector<8x32xf32>
    %cst_17 = arith.constant 5.000000e-01 : f32
    %22 = vector.broadcast %cst_17 : f32 to vector<8x32xf32>
    %23 = arith.mulf %22, %21 : vector<8x32xf32>
    %24 = math.exp %23 : vector<8x32xf32>
    %c0_18 = arith.constant 0 : index
    %c0_19 = arith.constant 0 : index
    %25 = vector.load %arg8[%c0_18, %c0_19] : memref<8x32xf32, #tpu.memory_space<vmem>>, vector<8x32xf32>
    %26 = arith.mulf %25, %24 : vector<8x32xf32>
    %27 = arith.addf %20, %26 : vector<8x32xf32>
    %c0_20 = arith.constant 0 : index
    %c0_21 = arith.constant 0 : index
    %28 = vector.load %arg9[%c0_20, %c0_21] : memref<8x32xf32, #tpu.memory_space<vmem>>, vector<8x32xf32>
    %29 = arith.mulf %28, %24 : vector<8x32xf32>
    %30 = arith.addf %20, %29 : vector<8x32xf32>
    %c0_22 = arith.constant 0 : index
    %c0_23 = arith.constant 0 : index
    %31 = vector.load %arg10[%c0_22, %c0_23] : memref<32x64xf32, #tpu.memory_space<vmem>>, vector<32x64xf32>
    %cst_24 = arith.constant dense<0.000000e+00> : vector<8x64xf32>
    %32 = tpu.matmul %27, %31, %cst_24 {dimension_numbers = #tpu.dot_dimension_numbers<[1], [0], [0], [1], [0, 0, 1, 1], [], []>} : vector<8x32xf32>, vector<32x64xf32>, vector<8x64xf32> -> vector<8x64xf32>
    %c0_25 = arith.constant 0 : index
    %c0_26 = arith.constant 0 : index
    %33 = vector.load %arg11[%c0_25, %c0_26] : memref<1x64xf32, #tpu.memory_space<vmem>>, vector<1x64xf32>
    %34 = vector.broadcast %33 : vector<1x64xf32> to vector<8x64xf32>
    %35 = arith.addf %32, %34 : vector<8x64xf32>
    %cst_27 = arith.constant 0.000000e+00 : f32
    %36 = vector.broadcast %cst_27 : f32 to vector<8x64xf32>
    %37 = arith.maximumf %35, %36 : vector<8x64xf32>
    %c0_28 = arith.constant 0 : index
    %c0_29 = arith.constant 0 : index
    %38 = vector.load %arg12[%c0_28, %c0_29] : memref<64x128xf32, #tpu.memory_space<vmem>>, vector<64x128xf32>
    %cst_30 = arith.constant dense<0.000000e+00> : vector<8x128xf32>
    %39 = tpu.matmul %37, %38, %cst_30 {dimension_numbers = #tpu.dot_dimension_numbers<[1], [0], [0], [1], [0, 0, 1, 1], [], []>} : vector<8x64xf32>, vector<64x128xf32>, vector<8x128xf32> -> vector<8x128xf32>
    %c0_31 = arith.constant 0 : index
    %c0_32 = arith.constant 0 : index
    %40 = vector.load %arg13[%c0_31, %c0_32] : memref<1x128xf32, #tpu.memory_space<vmem>>, vector<1x128xf32>
    %41 = vector.broadcast %40 : vector<1x128xf32> to vector<8x128xf32>
    %42 = arith.addf %39, %41 : vector<8x128xf32>
    %cst_33 = arith.constant 0.000000e+00 : f32
    %43 = vector.broadcast %cst_33 : f32 to vector<8x128xf32>
    %44 = arith.maximumf %42, %43 : vector<8x128xf32>
    %c0_34 = arith.constant 0 : index
    %c0_35 = arith.constant 0 : index
    %45 = vector.load %arg14[%c0_34, %c0_35] : memref<128x768xf32, #tpu.memory_space<vmem>>, vector<128x768xf32>
    %cst_36 = arith.constant dense<0.000000e+00> : vector<8x768xf32>
    %46 = tpu.matmul %44, %45, %cst_36 {dimension_numbers = #tpu.dot_dimension_numbers<[1], [0], [0], [1], [0, 0, 1, 1], [], []>} : vector<8x128xf32>, vector<128x768xf32>, vector<8x768xf32> -> vector<8x768xf32>
    %c0_37 = arith.constant 0 : index
    %c0_38 = arith.constant 0 : index
    %47 = vector.load %arg15[%c0_37, %c0_38] : memref<1x768xf32, #tpu.memory_space<vmem>>, vector<1x768xf32>
    %48 = vector.broadcast %47 : vector<1x768xf32> to vector<8x768xf32>
    %49 = arith.addf %46, %48 : vector<8x768xf32>
    %50 = vector.extract_strided_slice %49 {offsets = [0, 0], sizes = [8, 256], strides = [1, 1]} : vector<8x768xf32> to vector<8x256xf32>
    %51 = vector.extract_strided_slice %49 {offsets = [0, 256], sizes = [8, 256], strides = [1, 1]} : vector<8x768xf32> to vector<8x256xf32>
    %52 = vector.extract_strided_slice %49 {offsets = [0, 512], sizes = [8, 256], strides = [1, 1]} : vector<8x768xf32> to vector<8x256xf32>
    %53 = math.exp %50 : vector<8x256xf32>
    %cst_39 = arith.constant 9.99999974E-6 : f32
    %cst_40 = arith.constant 1.000000e+06 : f32
    %54 = vector.broadcast %cst_39 : f32 to vector<8x256xf32>
    %55 = arith.maximumf %54, %53 : vector<8x256xf32>
    %56 = vector.broadcast %cst_40 : f32 to vector<8x256xf32>
    %57 = arith.minimumf %56, %55 : vector<8x256xf32>
    %c0_41 = arith.constant 0 : index
    %c0_42 = arith.constant 0 : index
    %58 = vector.load %arg19[%c0_41, %c0_42] : memref<8x256xf32, #tpu.memory_space<vmem>>, vector<8x256xf32>
    tpu.vector_store %arg19[%c0_41, %c0_42], %57 {strides = array<i32>} : memref<8x256xf32, #tpu.memory_space<vmem>>, vector<8x256xf32>,
    %cst_43 = arith.constant 0.000000e+00 : f32
    %59 = vector.broadcast %cst_43 : f32 to vector<8x256xf32>
    %60 = arith.maximumf %51, %59 : vector<8x256xf32>
    %61 = math.absf %51 : vector<8x256xf32>
    %cst_44 = arith.constant 0.000000e+00 : f32
    %62 = vector.broadcast %cst_44 : f32 to vector<8x256xf32>
    %63 = arith.subf %62, %61 : vector<8x256xf32>
    %64 = math.exp %63 : vector<8x256xf32>
    %65 = math.log1p %64 : vector<8x256xf32>
    %66 = arith.addf %60, %65 : vector<8x256xf32>
    %cst_45 = arith.constant 9.99999974E-5 : f32
    %cst_46 = arith.constant 1.000000e+04 : f32
    %67 = vector.broadcast %cst_45 : f32 to vector<8x256xf32>
    %68 = arith.maximumf %67, %66 : vector<8x256xf32>
    %69 = vector.broadcast %cst_46 : f32 to vector<8x256xf32>
    %70 = arith.minimumf %69, %68 : vector<8x256xf32>
    %c0_47 = arith.constant 0 : index
    %c0_48 = arith.constant 0 : index
    %71 = vector.load %arg20[%c0_47, %c0_48] : memref<8x256xf32, #tpu.memory_space<vmem>>, vector<8x256xf32>
    tpu.vector_store %arg20[%c0_47, %c0_48], %70 {strides = array<i32>} : memref<8x256xf32, #tpu.memory_space<vmem>>, vector<8x256xf32>,
    %72 = arith.negf %52 : vector<8x256xf32>
    %73 = math.exp %72 : vector<8x256xf32>
    %cst_49 = arith.constant 1.000000e+00 : f32
    %74 = vector.broadcast %cst_49 : f32 to vector<8x256xf32>
    %75 = arith.addf %74, %73 : vector<8x256xf32>
    %76 = arith.divf %74, %75 : vector<8x256xf32>
    %c0_50 = arith.constant 0 : index
    %c0_51 = arith.constant 0 : index
    %77 = vector.load %arg21[%c0_50, %c0_51] : memref<8x256xf32, #tpu.memory_space<vmem>>, vector<8x256xf32>
    tpu.vector_store %arg21[%c0_50, %c0_51], %76 {strides = array<i32>} : memref<8x256xf32, #tpu.memory_space<vmem>>, vector<8x256xf32>,
    %78 = arith.mulf %30, %30 : vector<8x32xf32>
    %cst_52 = arith.constant dense<0.000000e+00> : vector<8xf32>
    %79 = vector.multi_reduction <add>, %78, %cst_52 [1] : vector<8x32xf32> to vector<8xf32>
    %80 = vector.shape_cast %79 : vector<8xf32> to vector<8x1xf32>
    %c0_53 = arith.constant 0 : index
    %c0_54 = arith.constant 0 : index
    %81 = vector.load %arg16[%c0_53, %c0_54] : memref<32x64xf32, #tpu.memory_space<vmem>>, vector<32x64xf32>
    %cst_55 = arith.constant dense<0.000000e+00> : vector<8x64xf32>
    %82 = tpu.matmul %30, %81, %cst_55 {dimension_numbers = #tpu.dot_dimension_numbers<[1], [0], [0], [1], [0, 0, 1, 1], [], []>} : vector<8x32xf32>, vector<32x64xf32>, vector<8x64xf32> -> vector<8x64xf32>
    %c0_56 = arith.constant 0 : index
    %c0_57 = arith.constant 0 : index
    %83 = vector.load %arg17[%c0_56, %c0_57] : memref<1x64xf32, #tpu.memory_space<vmem>>, vector<1x64xf32>
    %84 = vector.broadcast %80 : vector<8x1xf32> to vector<8x64xf32>
    %85 = vector.broadcast %83 : vector<1x64xf32> to vector<8x64xf32>
    %86 = arith.addf %84, %85 : vector<8x64xf32>
    %cst_58 = arith.constant 2.000000e+00 : f32
    %87 = vector.broadcast %cst_58 : f32 to vector<8x64xf32>
    %88 = arith.mulf %87, %82 : vector<8x64xf32>
    %89 = arith.subf %86, %88 : vector<8x64xf32>
    %cst_59 = arith.constant 0.000000e+00 : f32
    %90 = vector.broadcast %cst_59 : f32 to vector<8x64xf32>
    %91 = arith.maximumf %89, %90 : vector<8x64xf32>
    %92 = tpu.iota {dimensions = array<i32: 1>} : vector<8x64xi32>
    %c8_i32 = arith.constant 8 : i32
    %93 = vector.broadcast %c8_i32 : i32 to vector<8x64xi32>
    %94 = arith.cmpi slt, %92, %93 : vector<8x64xi32>
    %cst_60 = arith.constant 1.000000e+00 : f32
    %95 = vector.broadcast %cst_60 : f32 to vector<8x64xf32>
    %96 = arith.addf %95, %91 : vector<8x64xf32>
    %cst_61 = arith.constant 1.000000e+00 : f32
    %97 = vector.broadcast %cst_61 : f32 to vector<8x64xf32>
    %98 = arith.divf %97, %96 : vector<8x64xf32>
    %cst_62 = arith.constant 0.000000e+00 : f32
    %99 = vector.broadcast %cst_62 : f32 to vector<8x64xf32>
    %100 = arith.select %94, %98, %99 : vector<8x64xi1>, vector<8x64xf32>
    %cst_63 = arith.constant dense<0.000000e+00> : vector<8xf32>
    %101 = vector.multi_reduction <add>, %100, %cst_63 [1] : vector<8x64xf32> to vector<8xf32>
    %102 = vector.shape_cast %101 : vector<8xf32> to vector<8x1xf32>
    %103 = vector.broadcast %102 : vector<8x1xf32> to vector<8x64xf32>
    %104 = arith.divf %100, %103 : vector<8x64xf32>
    %105 = tpu.concatenate %19, %104 in 1 : vector<8x64xf32>, vector<8x64xf32> -> vector<8x128xf32>
    %c0_64 = arith.constant 0 : index
    %c0_65 = arith.constant 0 : index
    %106 = vector.load %arg18[%c0_64, %c0_65] : memref<8x128xf32, #tpu.memory_space<vmem>>, vector<8x128xf32>
    tpu.vector_store %arg18[%c0_64, %c0_65], %105 {strides = array<i32>} : memref<8x128xf32, #tpu.memory_space<vmem>>, vector<8x128xf32>,
    return
  }
  func.func @transform_0(%arg0: i32) -> (i32, i32) {
    %c0_i32 = arith.constant 0 : i32
    %c0_i32_0 = arith.constant 0 : i32
    return %arg0, %c0_i32 : i32, i32
  }
  func.func @transform_1(%arg0: i32) -> (i32, i32) {
    %c0_i32 = arith.constant 0 : i32
    %c0_i32_0 = arith.constant 0 : i32
    %c0_i32_1 = arith.constant 0 : i32
    return %c0_i32, %c0_i32_0 : i32, i32
  }
  func.func @transform_2(%arg0: i32) -> (i32, i32) {
    %c0_i32 = arith.constant 0 : i32
    %c0_i32_0 = arith.constant 0 : i32
    %c0_i32_1 = arith.constant 0 : i32
    return %c0_i32, %c0_i32_0 : i32, i32
  }
  func.func @transform_3(%arg0: i32) -> (i32, i32) {
    %c0_i32 = arith.constant 0 : i32
    %c0_i32_0 = arith.constant 0 : i32
    %c0_i32_1 = arith.constant 0 : i32
    return %c0_i32, %c0_i32_0 : i32, i32
  }
  func.func @transform_4(%arg0: i32) -> (i32, i32) {
    %c0_i32 = arith.constant 0 : i32
    %c0_i32_0 = arith.constant 0 : i32
    %c0_i32_1 = arith.constant 0 : i32
    return %c0_i32, %c0_i32_0 : i32, i32
  }
  func.func @transform_5(%arg0: i32) -> (i32, i32) {
    %c0_i32 = arith.constant 0 : i32
    %c0_i32_0 = arith.constant 0 : i32
    %c0_i32_1 = arith.constant 0 : i32
    return %c0_i32, %c0_i32_0 : i32, i32
  }
  func.func @transform_6(%arg0: i32) -> (i32, i32) {
    %c0_i32 = arith.constant 0 : i32
    %c0_i32_0 = arith.constant 0 : i32
    %c0_i32_1 = arith.constant 0 : i32
    return %c0_i32, %c0_i32_0 : i32, i32
  }
  func.func @transform_7(%arg0: i32) -> (i32, i32) {
    %c0_i32 = arith.constant 0 : i32
    %c0_i32_0 = arith.constant 0 : i32
    return %arg0, %c0_i32 : i32, i32
  }
  func.func @transform_8(%arg0: i32) -> (i32, i32) {
    %c0_i32 = arith.constant 0 : i32
    %c0_i32_0 = arith.constant 0 : i32
    return %arg0, %c0_i32 : i32, i32
  }
  func.func @transform_9(%arg0: i32) -> (i32, i32) {
    %c0_i32 = arith.constant 0 : i32
    %c0_i32_0 = arith.constant 0 : i32
    %c0_i32_1 = arith.constant 0 : i32
    return %c0_i32, %c0_i32_0 : i32, i32
  }
  func.func @transform_10(%arg0: i32) -> (i32, i32) {
    %c0_i32 = arith.constant 0 : i32
    %c0_i32_0 = arith.constant 0 : i32
    %c0_i32_1 = arith.constant 0 : i32
    return %c0_i32, %c0_i32_0 : i32, i32
  }
  func.func @transform_11(%arg0: i32) -> (i32, i32) {
    %c0_i32 = arith.constant 0 : i32
    %c0_i32_0 = arith.constant 0 : i32
    %c0_i32_1 = arith.constant 0 : i32
    return %c0_i32, %c0_i32_0 : i32, i32
  }
  func.func @transform_12(%arg0: i32) -> (i32, i32) {
    %c0_i32 = arith.constant 0 : i32
    %c0_i32_0 = arith.constant 0 : i32
    %c0_i32_1 = arith.constant 0 : i32
    return %c0_i32, %c0_i32_0 : i32, i32
  }
  func.func @transform_13(%arg0: i32) -> (i32, i32) {
    %c0_i32 = arith.constant 0 : i32
    %c0_i32_0 = arith.constant 0 : i32
    %c0_i32_1 = arith.constant 0 : i32
    return %c0_i32, %c0_i32_0 : i32, i32
  }
  func.func @transform_14(%arg0: i32) -> (i32, i32) {
    %c0_i32 = arith.constant 0 : i32
    %c0_i32_0 = arith.constant 0 : i32
    %c0_i32_1 = arith.constant 0 : i32
    return %c0_i32, %c0_i32_0 : i32, i32
  }
  func.func @transform_15(%arg0: i32) -> (i32, i32) {
    %c0_i32 = arith.constant 0 : i32
    %c0_i32_0 = arith.constant 0 : i32
    %c0_i32_1 = arith.constant 0 : i32
    return %c0_i32, %c0_i32_0 : i32, i32
  }
  func.func @transform_16(%arg0: i32) -> (i32, i32) {
    %c0_i32 = arith.constant 0 : i32
    %c0_i32_0 = arith.constant 0 : i32
    %c0_i32_1 = arith.constant 0 : i32
    return %c0_i32, %c0_i32_0 : i32, i32
  }
  func.func @transform_17(%arg0: i32) -> (i32, i32) {
    %c0_i32 = arith.constant 0 : i32
    %c0_i32_0 = arith.constant 0 : i32
    return %arg0, %c0_i32 : i32, i32
  }
  func.func @transform_18(%arg0: i32) -> (i32, i32) {
    %c0_i32 = arith.constant 0 : i32
    %c0_i32_0 = arith.constant 0 : i32
    return %arg0, %c0_i32 : i32, i32
  }
  func.func @transform_19(%arg0: i32) -> (i32, i32) {
    %c0_i32 = arith.constant 0 : i32
    %c0_i32_0 = arith.constant 0 : i32
    return %arg0, %c0_i32 : i32, i32
  }
  func.func @transform_20(%arg0: i32) -> (i32, i32) {
    %c0_i32 = arith.constant 0 : i32
    %c0_i32_0 = arith.constant 0 : i32
    return %arg0, %c0_i32 : i32, i32
  }
}

</mosaic_0001>

<llo_original>
// kernel: tpu_custom_call.1
$region0: #{tpu_custom_call.1}
  #allocation0 [shape = 'u32[]', space=smem, size = 0x4, offset = 0x4, fixed_abs, tag = 'smem constant byte address 0x4 - core index']
  #allocation1 [shape = 'u32[144,128]{1,0:T(1,128)}', space=vmem, size = 0x12000, scoped, tag = 'internal scratch']
  %s0 = inlined_call_operand.hbm [shape: f32[8,256], index: 0, kind: input, shape index: {}]
  %s1 = inlined_call_operand.hbm [shape: f32[256,128], index: 1, kind: input, shape index: {}]
  %s2 = inlined_call_operand.hbm [shape: f32[1,128], index: 2, kind: input, shape index: {}]
  %s3 = inlined_call_operand.vmem [shape: f32[128,64], index: 3, kind: input, shape index: {}]
  %s4 = inlined_call_operand.hbm [shape: f32[1,64], index: 4, kind: input, shape index: {}]
  %s5 = inlined_call_operand.vmem [shape: f32[64,64], index: 5, kind: input, shape index: {}]
  %s6 = inlined_call_operand.hbm [shape: f32[1,64], index: 6, kind: input, shape index: {}]
  %s7 = inlined_call_operand.vmem [shape: f32[8,32], index: 7, kind: input, shape index: {}]
  %s8 = inlined_call_operand.vmem [shape: f32[8,32], index: 8, kind: input, shape index: {}]
  %s9 = inlined_call_operand.vmem [shape: f32[32,64], index: 9, kind: input, shape index: {}]
  %s10 = inlined_call_operand.vmem [shape: f32[1,64], index: 10, kind: input, shape index: {}]
  %s11 = inlined_call_operand.vmem [shape: f32[64,128], index: 11, kind: input, shape index: {}]
  %s12 = inlined_call_operand.vmem [shape: f32[1,128], index: 12, kind: input, shape index: {}]
  %s13 = inlined_call_operand.hbm [shape: f32[128,768], index: 13, kind: input, shape index: {}]
  %s14 = inlined_call_operand.vmem [shape: f32[1,768], index: 14, kind: input, shape index: {}]
  %s15 = inlined_call_operand.vmem [shape: f32[32,64], index: 15, kind: input, shape index: {}]
  %s16 = inlined_call_operand.vmem [shape: f32[1,64], index: 16, kind: input, shape index: {}]
  %s17 = inlined_call_operand.hbm [shape: f32[8,128], index: 17, kind: output, shape index: {0}]
  %s18 = inlined_call_operand.hbm [shape: f32[8,256], index: 18, kind: output, shape index: {1}]
  %s19 = inlined_call_operand.hbm [shape: f32[8,256], index: 19, kind: output, shape index: {2}]
  %s20 = inlined_call_operand.hbm [shape: f32[8,256], index: 20, kind: output, shape index: {3}]
  %21 = xla_tuple %s17, %s18, %s19, %s20
  %s22 = sld [smem:[#allocation0]]
  $region126: #{tpu_custom_call.1} parent=0
    _
  %s24 = ssub.s32 1, %s22
  %s25 = scalar_select 0, %s24, %s22
  $region1: #{tpu_custom_call.1} parent=0
    #allocation2 [shape = 'u8[8192]{0}', space=vmem, size = 0x2000, scoped, tag = 'input window, operand 0, single buffered']
    #allocation3 [shape = 's32[1]{0}', space=sflag, size = 0x4, scoped, tag = 'scoped memory for tpu_custom_call.1']
    #allocation4 [shape = 's32[1]{0}', space=sflag, size = 0x4, scoped, tag = 'scoped memory for tpu_custom_call.1']
    #allocation5 [shape = 'u8[131072]{0}', space=vmem, size = 0x20000, scoped, tag = 'input window, operand 1, single buffered']
    #allocation6 [shape = 's32[1]{0}', space=sflag, size = 0x4, scoped, tag = 'scoped memory for tpu_custom_call.1']
    #allocation7 [shape = 'u8[512]{0}', space=vmem, size = 0x400, scoped, tag = 'input window, operand 2, single buffered']
    #allocation8 [shape = 'u8[512]{0}', space=vmem, size = 0x400, scoped, tag = 'input window, operand 4, single buffered']
    #allocation9 [shape = 's32[1]{0}', space=sflag, size = 0x4, scoped, tag = 'scoped memory for tpu_custom_call.1']
    #allocation10 [shape = 'u8[512]{0}', space=vmem, size = 0x400, scoped, tag = 'input window, operand 6, single buffered']
    #allocation11 [shape = 'u8[393216]{0}', space=vmem, size = 0x60000, scoped, tag = 'input window, operand 13, single buffered']
    #allocation12 [shape = 's32[1]{0}', space=sflag, size = 0x4, scoped, tag = 'scoped memory for tpu_custom_call.1']
    #allocation13 [shape = 'u8[4096]{0}', space=vmem, size = 0x1000, scoped, tag = 'output window, operand 0, single buffered']
    #allocation14 [shape = 'u8[8192]{0}', space=vmem, size = 0x2000, scoped, tag = 'output window, operand 1, single buffered']
    #allocation15 [shape = 's32[1]{0}', space=sflag, size = 0x4, scoped, tag = 'scoped memory for tpu_custom_call.1']
    #allocation16 [shape = 'u8[8192]{0}', space=vmem, size = 0x2000, scoped, tag = 'output window, operand 2, single buffered']
    #allocation17 [shape = 'u8[8192]{0}', space=vmem, size = 0x2000, scoped, tag = 'output window, operand 3, single buffered']
    #allocation18 [shape = 's32[1]{0}', space=sflag, size = 0x4, scoped, tag = 'scoped memory for tpu_custom_call.1']
    %26 = vsyncpa [#allocation3], 0
    %27 = vsyncpa [#allocation6], 0
    %28 = vsyncpa [#allocation9], 0
    %29 = vsyncpa [#allocation12], 0
    %30 = vsyncpa [#allocation4], 0
    %31 = vsyncpa [#allocation15], 0
    %32 = vsyncpa [#allocation18], 0
    // Predicated region
    $region2: #{tpu_custom_call.1} parent=1 // pred_check
      _
    $region3: #{tpu_custom_call.1} parent=1 // pred_check_branch
      %34 = sbr.rel (0) target = $region5
    $region4: #{tpu_custom_call.1} parent=1 // pred_region
      %s36 = ssub.s32 256, 256
      %37 = vsyncadd [#allocation3], %s36
      %s39 = sshll.u32 [#allocation2], 4
      %s40 = int_to_ptr.vmem [resolvable:$true] %s39
      %42 = dma.hbm_to_vmem [thread:$0]  %s0, 256, %s40, [#allocation3]
    $region5: #{tpu_custom_call.1} parent=1 // pred_fallthru
      _
    // Predicated region
    $region6: #{tpu_custom_call.1} parent=1 // pred_check
      _
    $region7: #{tpu_custom_call.1} parent=1 // pred_check_branch
      %44 = sbr.rel (0) target = $region9
    $region8: #{tpu_custom_call.1} parent=1 // pred_region
      %s46 = ssub.s32 4096, 4096
      %47 = vsyncadd [#allocation6], %s46
      %s48 = sshll.u32 [#allocation5], 4
      %s49 = int_to_ptr.vmem [resolvable:$true] %s48
      %54 = dma.hbm_to_vmem [thread:$0]  %s1, 4096, %s49, [#allocation6], 128, 128, 8
    $region9: #{tpu_custom_call.1} parent=1 // pred_fallthru
      _
    // Predicated region
    $region10: #{tpu_custom_call.1} parent=1 // pred_check
      _
    $region11: #{tpu_custom_call.1} parent=1 // pred_check_branch
      %56 = sbr.rel (0) target = $region13
    $region12: #{tpu_custom_call.1} parent=1 // pred_region
      %s58 = ssub.s32 16, 16
      %59 = vsyncadd [#allocation6], %s58
      %s61 = sshll.u32 [#allocation7], 4
      %s62 = int_to_ptr.vmem [resolvable:$true] %s61
      %64 = dma.hbm_to_vmem [thread:$0]  %s2, 16, %s62, [#allocation6]
    $region13: #{tpu_custom_call.1} parent=1 // pred_fallthru
      _
    // Predicated region
    $region14: #{tpu_custom_call.1} parent=1 // pred_check
      _
    $region15: #{tpu_custom_call.1} parent=1 // pred_check_branch
      %66 = sbr.rel (0) target = $region17
    $region16: #{tpu_custom_call.1} parent=1 // pred_region
      _
    $region17: #{tpu_custom_call.1} parent=1 // pred_fallthru
      _
    // Predicated region
    $region18: #{tpu_custom_call.1} parent=1 // pred_check
      _
    $region19: #{tpu_custom_call.1} parent=1 // pred_check_branch
      %68 = sbr.rel (0) target = $region21
    $region20: #{tpu_custom_call.1} parent=1 // pred_region
      %s70 = ssub.s32 16, 16
      %71 = vsyncadd [#allocation9], %s70
      %s73 = sshll.u32 [#allocation8], 4
      %s74 = int_to_ptr.vmem [resolvable:$true] %s73
      %76 = dma.hbm_to_vmem [thread:$0]  %s4, 16, %s74, [#allocation9]
    $region21: #{tpu_custom_call.1} parent=1 // pred_fallthru
      _
    // Predicated region
    $region22: #{tpu_custom_call.1} parent=1 // pred_check
      _
    $region23: #{tpu_custom_call.1} parent=1 // pred_check_branch
      %78 = sbr.rel (0) target = $region25
    $region24: #{tpu_custom_call.1} parent=1 // pred_region
      _
    $region25: #{tpu_custom_call.1} parent=1 // pred_fallthru
      _
    // Predicated region
    $region26: #{tpu_custom_call.1} parent=1 // pred_check
      _
    $region27: #{tpu_custom_call.1} parent=1 // pred_check_branch
      %80 = sbr.rel (0) target = $region29
    $region28: #{tpu_custom_call.1} parent=1 // pred_region
      %s82 = ssub.s32 16, 16
      %83 = vsyncadd [#allocation9], %s82
      %s85 = sshll.u32 [#allocation10], 4
      %s86 = int_to_ptr.vmem [resolvable:$true] %s85
      %88 = dma.hbm_to_vmem [thread:$0]  %s6, 16, %s86, [#allocation9]
    $region29: #{tpu_custom_call.1} parent=1 // pred_fallthru
      _
    // Predicated region
    $region30: #{tpu_custom_call.1} parent=1 // pred_check
      _
    $region31: #{tpu_custom_call.1} parent=1 // pred_check_branch
      %90 = sbr.rel (0) target = $region33
    $region32: #{tpu_custom_call.1} parent=1 // pred_region
      _
    $region33: #{tpu_custom_call.1} parent=1 // pred_fallthru
      _
    // Predicated region
    $region34: #{tpu_custom_call.1} parent=1 // pred_check
      _
    $region35: #{tpu_custom_call.1} parent=1 // pred_check_branch
      %92 = sbr.rel (0) target = $region37
    $region36: #{tpu_custom_call.1} parent=1 // pred_region
      _
    $region37: #{tpu_custom_call.1} parent=1 // pred_fallthru
      _
    // Predicated region
    $region38: #{tpu_custom_call.1} parent=1 // pred_check
      _
    $region39: #{tpu_custom_call.1} parent=1 // pred_check_branch
      %94 = sbr.rel (0) target = $region41
    $region40: #{tpu_custom_call.1} parent=1 // pred_region
      _
    $region41: #{tpu_custom_call.1} parent=1 // pred_fallthru
      _
    // Predicated region
    $region42: #{tpu_custom_call.1} parent=1 // pred_check
      _
    $region43: #{tpu_custom_call.1} parent=1 // pred_check_branch
      %96 = sbr.rel (0) target = $region45
    $region44: #{tpu_custom_call.1} parent=1 // pred_region
      _
    $region45: #{tpu_custom_call.1} parent=1 // pred_fallthru
      _
    // Predicated region
    $region46: #{tpu_custom_call.1} parent=1 // pred_check
      _
    $region47: #{tpu_custom_call.1} parent=1 // pred_check_branch
      %98 = sbr.rel (0) target = $region49
    $region48: #{tpu_custom_call.1} parent=1 // pred_region
      _
    $region49: #{tpu_custom_call.1} parent=1 // pred_fallthru
      _
    // Predicated region
    $region50: #{tpu_custom_call.1} parent=1 // pred_check
      _
    $region51: #{tpu_custom_call.1} parent=1 // pred_check_branch
      %100 = sbr.rel (0) target = $region53
    $region52: #{tpu_custom_call.1} parent=1 // pred_region
      _
    $region53: #{tpu_custom_call.1} parent=1 // pred_fallthru
      _
    // Predicated region
    $region54: #{tpu_custom_call.1} parent=1 // pred_check
      _
    $region55: #{tpu_custom_call.1} parent=1 // pred_check_branch
      %102 = sbr.rel (0) target = $region57
    $region56: #{tpu_custom_call.1} parent=1 // pred_region
      %s104 = ssub.s32 12288, 12288
      %105 = vsyncadd [#allocation12], %s104
      %s106 = sshll.u32 [#allocation11], 4
      %s107 = int_to_ptr.vmem [resolvable:$true] %s106
      %112 = dma.hbm_to_vmem [thread:$0]  %s13, 12288, %s107, [#allocation12], 768, 768, 48
    $region57: #{tpu_custom_call.1} parent=1 // pred_fallthru
      _
    // Predicated region
    $region58: #{tpu_custom_call.1} parent=1 // pred_check
      _
    $region59: #{tpu_custom_call.1} parent=1 // pred_check_branch
      %114 = sbr.rel (0) target = $region61
    $region60: #{tpu_custom_call.1} parent=1 // pred_region
      _
    $region61: #{tpu_custom_call.1} parent=1 // pred_fallthru
      _
    // Predicated region
    $region62: #{tpu_custom_call.1} parent=1 // pred_check
      _
    $region63: #{tpu_custom_call.1} parent=1 // pred_check_branch
      %116 = sbr.rel (0) target = $region65
    $region64: #{tpu_custom_call.1} parent=1 // pred_region
      _
    $region65: #{tpu_custom_call.1} parent=1 // pred_fallthru
      _
    // Predicated region
    $region66: #{tpu_custom_call.1} parent=1 // pred_check
      _
    $region67: #{tpu_custom_call.1} parent=1 // pred_check_branch
      %118 = sbr.rel (0) target = $region69
    $region68: #{tpu_custom_call.1} parent=1 // pred_region
      _
    $region69: #{tpu_custom_call.1} parent=1 // pred_fallthru
      _
    // Predicated region
    $region70: #{tpu_custom_call.1} parent=1 // pred_check
      _
    $region71: #{tpu_custom_call.1} parent=1 // pred_check_branch
      %120 = sbr.rel (0) target = $region73
    $region72: #{tpu_custom_call.1} parent=1 // pred_region
      %121 = dma.done [#allocation3], 256
    $region73: #{tpu_custom_call.1} parent=1 // pred_fallthru
      _
    // Predicated region
    $region74: #{tpu_custom_call.1} parent=1 // pred_check
      _
    $region75: #{tpu_custom_call.1} parent=1 // pred_check_branch
      %123 = sbr.rel (0) target = $region77
    $region76: #{tpu_custom_call.1} parent=1 // pred_region
      %124 = dma.done [#allocation6], 4096
    $region77: #{tpu_custom_call.1} parent=1 // pred_fallthru
      _
    // Predicated region
    $region78: #{tpu_custom_call.1} parent=1 // pred_check
      _
    $region79: #{tpu_custom_call.1} parent=1 // pred_check_branch
      %126 = sbr.rel (0) target = $region81
    $region80: #{tpu_custom_call.1} parent=1 // pred_region
      %127 = dma.done [#allocation6], 16
    $region81: #{tpu_custom_call.1} parent=1 // pred_fallthru
      _
    // Predicated region
    $region82: #{tpu_custom_call.1} parent=1 // pred_check
      _
    $region83: #{tpu_custom_call.1} parent=1 // pred_check_branch
      %129 = sbr.rel (0) target = $region85
    $region84: #{tpu_custom_call.1} parent=1 // pred_region
      %130 = dma.done [#allocation9], 16
    $region85: #{tpu_custom_call.1} parent=1 // pred_fallthru
      _
    // Predicated region
    $region86: #{tpu_custom_call.1} parent=1 // pred_check
      _
    $region87: #{tpu_custom_call.1} parent=1 // pred_check_branch
      %132 = sbr.rel (0) target = $region89
    $region88: #{tpu_custom_call.1} parent=1 // pred_region
      %133 = dma.done [#allocation9], 16
    $region89: #{tpu_custom_call.1} parent=1 // pred_fallthru
      _
    // Predicated region
    $region90: #{tpu_custom_call.1} parent=1 // pred_check
      _
    $region91: #{tpu_custom_call.1} parent=1 // pred_check_branch
      %135 = sbr.rel (0) target = $region93
    $region92: #{tpu_custom_call.1} parent=1 // pred_region
      %136 = dma.done [#allocation12], 12288
    $region93: #{tpu_custom_call.1} parent=1 // pred_fallthru
      _
    %v137 = vld [vmem:[#allocation2] sm:$0xff]
    %v138 = vld [vmem:[#allocation2 + $0x8] sm:$0xff]
    %v139 = vld [vmem:[#allocation5] sm:$0xff]
    %v140 = vld [vmem:[#allocation5 + $0x8] sm:$0xff]
    %v141 = vld [vmem:[#allocation5 + $0x10] sm:$0xff]
    %v142 = vld [vmem:[#allocation5 + $0x18] sm:$0xff]
    %v143 = vld [vmem:[#allocation5 + $0x20] sm:$0xff]
    %v144 = vld [vmem:[#allocation5 + $0x28] sm:$0xff]
    %v145 = vld [vmem:[#allocation5 + $0x30] sm:$0xff]
    %v146 = vld [vmem:[#allocation5 + $0x38] sm:$0xff]
    %v147 = vld [vmem:[#allocation5 + $0x40] sm:$0xff]
    %v148 = vld [vmem:[#allocation5 + $0x48] sm:$0xff]
    %v149 = vld [vmem:[#allocation5 + $0x50] sm:$0xff]
    %v150 = vld [vmem:[#allocation5 + $0x58] sm:$0xff]
    %v151 = vld [vmem:[#allocation5 + $0x60] sm:$0xff]
    %v152 = vld [vmem:[#allocation5 + $0x68] sm:$0xff]
    %v153 = vld [vmem:[#allocation5 + $0x70] sm:$0xff]
    %v154 = vld [vmem:[#allocation5 + $0x78] sm:$0xff]
    %v155 = vld [vmem:[#allocation5 + $0x80] sm:$0xff]
    %v156 = vld [vmem:[#allocation5 + $0x88] sm:$0xff]
    %v157 = vld [vmem:[#allocation5 + $0x90] sm:$0xff]
    %v158 = vld [vmem:[#allocation5 + $0x98] sm:$0xff]
    %v159 = vld [vmem:[#allocation5 + $0xa0] sm:$0xff]
    %v160 = vld [vmem:[#allocation5 + $0xa8] sm:$0xff]
    %v161 = vld [vmem:[#allocation5 + $0xb0] sm:$0xff]
    %v162 = vld [vmem:[#allocation5 + $0xb8] sm:$0xff]
    %v163 = vld [vmem:[#allocation5 + $0xc0] sm:$0xff]
    %v164 = vld [vmem:[#allocation5 + $0xc8] sm:$0xff]
    %v165 = vld [vmem:[#allocation5 + $0xd0] sm:$0xff]
    %v166 = vld [vmem:[#allocation5 + $0xd8] sm:$0xff]
    %v167 = vld [vmem:[#allocation5 + $0xe0] sm:$0xff]
    %v168 = vld [vmem:[#allocation5 + $0xe8] sm:$0xff]
    %v169 = vld [vmem:[#allocation5 + $0xf0] sm:$0xff]
    %v170 = vld [vmem:[#allocation5 + $0xf8] sm:$0xff]
    %v171 = vld [vmem:[#allocation7] sm:$0x1]
    %v173 = vlaneseq
    %v174 = vshrl.u32 %v173, 7
    %v175 = vsub.s32 0, %v174
    %v176 = vrot.slane %v171, %v175
    %178 = vmatprep.subr.mxu0 0.0
    %179 = vmatpush1.msra.mxu0 %v139
    %180 = vmatprep.subr.mxu0 0.0
    %181 = vmatpush1.msra.mxu0 %v140
    %182 = vmatprep.subr.mxu0 0.0
    %183 = vmatpush1.msra.mxu0 %v141
    %184 = vmatprep.subr.mxu0 0.0
    %185 = vmatpush1.msra.mxu0 %v142
    %186 = vmatprep.subr.mxu0 0.0
    %187 = vmatpush1.msra.mxu0 %v143
    %188 = vmatprep.subr.mxu0 0.0
    %189 = vmatpush1.msra.mxu0 %v144
    %190 = vmatprep.subr.mxu0 0.0
    %191 = vmatpush1.msra.mxu0 %v145
    %192 = vmatprep.subr.mxu0 0.0
    %193 = vmatpush1.msra.mxu0 %v146
    %194 = vmatprep.subr.mxu0 0.0
    %195 = vmatpush1.msra.mxu0 %v147
    %196 = vmatprep.subr.mxu0 0.0
    %197 = vmatpush1.msra.mxu0 %v148
    %198 = vmatprep.subr.mxu0 0.0
    %199 = vmatpush1.msra.mxu0 %v149
    %200 = vmatprep.subr.mxu0 0.0
    %201 = vmatpush1.msra.mxu0 %v150
    %202 = vmatprep.subr.mxu0 0.0
    %203 = vmatpush1.msra.mxu0 %v151
    %204 = vmatprep.subr.mxu0 0.0
    %205 = vmatpush1.msra.mxu0 %v152
    %206 = vmatprep.subr.mxu0 0.0
    %207 = vmatpush1.msra.mxu0 %v153
    %208 = vmatprep.subr.mxu0 0.0
    %209 = vmatpush1.msra.mxu0 %v154
    %210 = vmatprep.subr.mxu0 0.0
    %211 = vmatpush1.msra.mxu0 %v155
    %212 = vmatprep.subr.mxu0 0.0
    %213 = vmatpush1.msra.mxu0 %v156
    %214 = vmatprep.subr.mxu0 0.0
    %215 = vmatpush1.msra.mxu0 %v157
    %216 = vmatprep.subr.mxu0 0.0
    %217 = vmatpush1.msra.mxu0 %v158
    %218 = vmatprep.subr.mxu0 0.0
    %219 = vmatpush1.msra.mxu0 %v159
    %220 = vmatprep.subr.mxu0 0.0
    %221 = vmatpush1.msra.mxu0 %v160
    %222 = vmatprep.subr.mxu0 0.0
    %223 = vmatpush1.msra.mxu0 %v161
    %224 = vmatprep.subr.mxu0 0.0
    %225 = vmatpush1.msra.mxu0 %v162
    %226 = vmatprep.subr.mxu0 0.0
    %227 = vmatpush1.msra.mxu0 %v163
    %228 = vmatprep.subr.mxu0 0.0
    %229 = vmatpush1.msra.mxu0 %v164
    %230 = vmatprep.subr.mxu0 0.0
    %231 = vmatpush1.msra.mxu0 %v165
    %232 = vmatprep.subr.mxu0 0.0
    %233 = vmatpush1.msra.mxu0 %v166
    %234 = vmatprep.subr.mxu0 0.0
    %235 = vmatpush1.msra.mxu0 %v167
    %236 = vmatprep.subr.mxu0 0.0
    %237 = vmatpush1.msra.mxu0 %v168
    %238 = vmatprep.subr.mxu0 0.0
    %239 = vmatpush1.msra.mxu0 %v169
    %240 = vmatprep.subr.mxu0 0.0
    %241 = vmatpush1.msra.mxu0 %v170
    %242 = vmatprep.mubr.f32.mxu0 %v138
    %243 = vmatmul.mubr.f32.gmra.mrb[0].mxu0 %v137
    %v244 = vpop.f32.mrb[0].mxu0
    %v245 = vadd.f32 %v176, %v244
    %v246 = vpop.f32.mrb[0].mxu0
    %247 = vdwg.mxu0
    %v248 = vmax.f32 %v245, 0.0
    %v249 = vld [vmem:[%s3] sm:$0xff]
    %v250 = vld [vmem:[%s3 + $0x8] sm:$0xff]
    %v251 = vld [vmem:[%s3 + $0x10] sm:$0xff]
    %v252 = vld [vmem:[%s3 + $0x18] sm:$0xff]
    %v253 = vld [vmem:[%s3 + $0x20] sm:$0xff]
    %v254 = vld [vmem:[%s3 + $0x28] sm:$0xff]
    %v255 = vld [vmem:[%s3 + $0x30] sm:$0xff]
    %v256 = vld [vmem:[%s3 + $0x38] sm:$0xff]
    %v257 = vld [vmem:[%s3 + $0x40] sm:$0xff]
    %v258 = vld [vmem:[%s3 + $0x48] sm:$0xff]
    %v259 = vld [vmem:[%s3 + $0x50] sm:$0xff]
    %v260 = vld [vmem:[%s3 + $0x58] sm:$0xff]
    %v261 = vld [vmem:[%s3 + $0x60] sm:$0xff]
    %v262 = vld [vmem:[%s3 + $0x68] sm:$0xff]
    %v263 = vld [vmem:[%s3 + $0x70] sm:$0xff]
    %v264 = vld [vmem:[%s3 + $0x78] sm:$0xff]
    %v265 = vld [vmem:[#allocation8] sm:$0x1]
    %v267 = vlaneseq
    %v268 = vshrl.u32 %v267, 7
    %v269 = vsub.s32 0, %v268
    %v270 = vrot.slane %v265, %v269
    %272 = vmatprep.subr.mxu0 0.0
    %273 = vmatpush1.msra.mxu0 %v249
    %274 = vmatprep.subr.mxu0 0.0
    %275 = vmatpush1.msra.mxu0 %v250
    %276 = vmatprep.subr.mxu0 0.0
    %277 = vmatpush1.msra.mxu0 %v251
    %278 = vmatprep.subr.mxu0 0.0
    %279 = vmatpush1.msra.mxu0 %v252
    %280 = vmatprep.subr.mxu0 0.0
    %281 = vmatpush1.msra.mxu0 %v253
    %282 = vmatprep.subr.mxu0 0.0
    %283 = vmatpush1.msra.mxu0 %v254
    %284 = vmatprep.subr.mxu0 0.0
    %285 = vmatpush1.msra.mxu0 %v255
    %286 = vmatprep.subr.mxu0 0.0
    %287 = vmatpush1.msra.mxu0 %v256
    %288 = vmatprep.subr.mxu0 0.0
    %289 = vmatpush1.msra.mxu0 %v257
    %290 = vmatprep.subr.mxu0 0.0
    %291 = vmatpush1.msra.mxu0 %v258
    %292 = vmatprep.subr.mxu0 0.0
    %293 = vmatpush1.msra.mxu0 %v259
    %294 = vmatprep.subr.mxu0 0.0
    %295 = vmatpush1.msra.mxu0 %v260
    %296 = vmatprep.subr.mxu0 0.0
    %297 = vmatpush1.msra.mxu0 %v261
    %298 = vmatprep.subr.mxu0 0.0
    %299 = vmatpush1.msra.mxu0 %v262
    %300 = vmatprep.subr.mxu0 0.0
    %301 = vmatpush1.msra.mxu0 %v263
    %302 = vmatprep.subr.mxu0 0.0
    %303 = vmatpush1.msra.mxu0 %v264
    %304 = vmatprep.subr.mxu0 0.0
    %305 = vmatpush1.msra.mxu0 0.0
    %306 = vmatprep.subr.mxu0 0.0
    %307 = vmatpush1.msra.mxu0 0.0
    %308 = vmatprep.subr.mxu0 0.0
    %309 = vmatpush1.msra.mxu0 0.0
    %310 = vmatprep.subr.mxu0 0.0
    %311 = vmatpush1.msra.mxu0 0.0
    %312 = vmatprep.subr.mxu0 0.0
    %313 = vmatpush1.msra.mxu0 0.0
    %314 = vmatprep.subr.mxu0 0.0
    %315 = vmatpush1.msra.mxu0 0.0
    %316 = vmatprep.subr.mxu0 0.0
    %317 = vmatpush1.msra.mxu0 0.0
    %318 = vmatprep.subr.mxu0 0.0
    %319 = vmatpush1.msra.mxu0 0.0
    %320 = vmatprep.subr.mxu0 0.0
    %321 = vmatpush1.msra.mxu0 0.0
    %322 = vmatprep.subr.mxu0 0.0
    %323 = vmatpush1.msra.mxu0 0.0
    %324 = vmatprep.subr.mxu0 0.0
    %325 = vmatpush1.msra.mxu0 0.0
    %326 = vmatprep.subr.mxu0 0.0
    %327 = vmatpush1.msra.mxu0 0.0
    %328 = vmatprep.subr.mxu0 0.0
    %329 = vmatpush1.msra.mxu0 0.0
    %330 = vmatprep.subr.mxu0 0.0
    %331 = vmatpush1.msra.mxu0 0.0
    %332 = vmatprep.subr.mxu0 0.0
    %333 = vmatpush1.msra.mxu0 0.0
    %334 = vmatprep.subr.mxu0 0.0
    %335 = vmatpush1.msra.mxu0 0.0
    %336 = vmatprep.mubr.f32.mxu0 0.0
    %337 = vmatmul.mubr.f32.gmra.mrb[0].mxu0 %v248
    %v338 = vpop.f32.mrb[0].mxu0
    %v339 = vadd.f32 %v270, %v338
    %v340 = vpop.f32.mrb[0].mxu0
    %341 = vdwg.mxu0
    %v342 = vmax.f32 %v339, 0.0
    %v343 = vld [vmem:[%s5] sm:$0xff]
    %v344 = vld [vmem:[%s5 + $0x8] sm:$0xff]
    %v345 = vld [vmem:[%s5 + $0x10] sm:$0xff]
    %v346 = vld [vmem:[%s5 + $0x18] sm:$0xff]
    %v347 = vld [vmem:[%s5 + $0x20] sm:$0xff]
    %v348 = vld [vmem:[%s5 + $0x28] sm:$0xff]
    %v349 = vld [vmem:[%s5 + $0x30] sm:$0xff]
    %v350 = vld [vmem:[%s5 + $0x38] sm:$0xff]
    %v351 = vld [vmem:[#allocation10] sm:$0x1]
    %v353 = vlaneseq
    %v354 = vshrl.u32 %v353, 7
    %v355 = vsub.s32 0, %v354
    %v356 = vrot.slane %v351, %v355
    %vm358 = vcmask 523264
    %v360 = vsel %vm358, %v342, 0
    %362 = vmatprep.subr.mxu0 0.0
    %363 = vmatpush1.msra.mxu0 %v343
    %364 = vmatprep.subr.mxu0 0.0
    %365 = vmatpush1.msra.mxu0 %v344
    %366 = vmatprep.subr.mxu0 0.0
    %367 = vmatpush1.msra.mxu0 %v345
    %368 = vmatprep.subr.mxu0 0.0
    %369 = vmatpush1.msra.mxu0 %v346
    %370 = vmatprep.subr.mxu0 0.0
    %371 = vmatpush1.msra.mxu0 %v347
    %372 = vmatprep.subr.mxu0 0.0
    %373 = vmatpush1.msra.mxu0 %v348
    %374 = vmatprep.subr.mxu0 0.0
    %375 = vmatpush1.msra.mxu0 %v349
    %376 = vmatprep.subr.mxu0 0.0
    %377 = vmatpush1.msra.mxu0 %v350
    %378 = vmatprep.subr.mxu0 0.0
    %379 = vmatpush1.msra.mxu0 0.0
    %380 = vmatprep.subr.mxu0 0.0
    %381 = vmatpush1.msra.mxu0 0.0
    %382 = vmatprep.subr.mxu0 0.0
    %383 = vmatpush1.msra.mxu0 0.0
    %384 = vmatprep.subr.mxu0 0.0
    %385 = vmatpush1.msra.mxu0 0.0
    %386 = vmatprep.subr.mxu0 0.0
    %387 = vmatpush1.msra.mxu0 0.0
    %388 = vmatprep.subr.mxu0 0.0
    %389 = vmatpush1.msra.mxu0 0.0
    %390 = vmatprep.subr.mxu0 0.0
    %391 = vmatpush1.msra.mxu0 0.0
    %392 = vmatprep.subr.mxu0 0.0
    %393 = vmatpush1.msra.mxu0 0.0
    %394 = vmatprep.subr.mxu0 0.0
    %395 = vmatpush1.msra.mxu0 0.0
    %396 = vmatprep.subr.mxu0 0.0
    %397 = vmatpush1.msra.mxu0 0.0
    %398 = vmatprep.subr.mxu0 0.0
    %399 = vmatpush1.msra.mxu0 0.0
    %400 = vmatprep.subr.mxu0 0.0
    %401 = vmatpush1.msra.mxu0 0.0
    %402 = vmatprep.subr.mxu0 0.0
    %403 = vmatpush1.msra.mxu0 0.0
    %404 = vmatprep.subr.mxu0 0.0
    %405 = vmatpush1.msra.mxu0 0.0
    %406 = vmatprep.subr.mxu0 0.0
    %407 = vmatpush1.msra.mxu0 0.0
    %408 = vmatprep.subr.mxu0 0.0
    %409 = vmatpush1.msra.mxu0 0.0
    %410 = vmatprep.subr.mxu0 0.0
    %411 = vmatpush1.msra.mxu0 0.0
    %412 = vmatprep.subr.mxu0 0.0
    %413 = vmatpush1.msra.mxu0 0.0
    %414 = vmatprep.subr.mxu0 0.0
    %415 = vmatpush1.msra.mxu0 0.0
    %416 = vmatprep.subr.mxu0 0.0
    %417 = vmatpush1.msra.mxu0 0.0
    %418 = vmatprep.subr.mxu0 0.0
    %419 = vmatpush1.msra.mxu0 0.0
    %420 = vmatprep.subr.mxu0 0.0
    %421 = vmatpush1.msra.mxu0 0.0
    %422 = vmatprep.subr.mxu0 0.0
    %423 = vmatpush1.msra.mxu0 0.0
    %424 = vmatprep.subr.mxu0 0.0
    %425 = vmatpush1.msra.mxu0 0.0
    %426 = vmatprep.mubr.f32.mxu0 0.0
    %427 = vmatmul.mubr.f32.gmra.mrb[0].mxu0 %v360
    %v428 = vpop.f32.mrb[0].mxu0
    %v429 = vadd.f32 %v356, %v428
    %v430 = vpop.f32.mrb[0].mxu0
    %431 = vdwg.mxu0
    %v432 = vmul.f32 %v429, 0.5
    %v433 = vmul.f32 %v432, 1.442695
    %v434 = vpow.pop %v433
    %v435 = vld [vmem:[%s7] sm:$0xff]
    %437 = vrot.lane.b32.xlu0 %v434, 96
    %v438 = vpop.permute.xlu0 %437
    %v440 = vmul.f32 %v435, %v438
    %v441 = vadd.f32 %v429, %v440
    %v442 = vld [vmem:[%s8] sm:$0xff]
    %v443 = vmul.f32 %v442, %v438
    %v444 = vadd.f32 %v429, %v443
    %v445 = vld [vmem:[%s9] sm:$0xff]
    %v446 = vld [vmem:[%s9 + $0x8] sm:$0xff]
    %v447 = vld [vmem:[%s9 + $0x10] sm:$0xff]
    %v448 = vld [vmem:[%s9 + $0x18] sm:$0xff]
    %v449 = vld [vmem:[%s10] sm:$0x1]
    %v451 = vlaneseq
    %v452 = vshrl.u32 %v451, 7
    %v453 = vsub.s32 0, %v452
    %v454 = vrot.slane %v449, %v453
    %vm456 = vcmask 261120
    %v458 = vsel %vm456, %v441, 0
    %460 = vmatprep.subr.mxu0 0.0
    %461 = vmatpush1.msra.mxu0 %v445
    %462 = vmatprep.subr.mxu0 0.0
    %463 = vmatpush1.msra.mxu0 %v446
    %464 = vmatprep.subr.mxu0 0.0
    %465 = vmatpush1.msra.mxu0 %v447
    %466 = vmatprep.subr.mxu0 0.0
    %467 = vmatpush1.msra.mxu0 %v448
    %468 = vmatprep.subr.mxu0 0.0
    %469 = vmatpush1.msra.mxu0 0.0
    %470 = vmatprep.subr.mxu0 0.0
    %471 = vmatpush1.msra.mxu0 0.0
    %472 = vmatprep.subr.mxu0 0.0
    %473 = vmatpush1.msra.mxu0 0.0
    %474 = vmatprep.subr.mxu0 0.0
    %475 = vmatpush1.msra.mxu0 0.0
    %476 = vmatprep.subr.mxu0 0.0
    %477 = vmatpush1.msra.mxu0 0.0
    %478 = vmatprep.subr.mxu0 0.0
    %479 = vmatpush1.msra.mxu0 0.0
    %480 = vmatprep.subr.mxu0 0.0
    %481 = vmatpush1.msra.mxu0 0.0
    %482 = vmatprep.subr.mxu0 0.0
    %483 = vmatpush1.msra.mxu0 0.0
    %484 = vmatprep.subr.mxu0 0.0
    %485 = vmatpush1.msra.mxu0 0.0
    %486 = vmatprep.subr.mxu0 0.0
    %487 = vmatpush1.msra.mxu0 0.0
    %488 = vmatprep.subr.mxu0 0.0
    %489 = vmatpush1.msra.mxu0 0.0
    %490 = vmatprep.subr.mxu0 0.0
    %491 = vmatpush1.msra.mxu0 0.0
    %492 = vmatprep.subr.mxu0 0.0
    %493 = vmatpush1.msra.mxu0 0.0
    %494 = vmatprep.subr.mxu0 0.0
    %495 = vmatpush1.msra.mxu0 0.0
    %496 = vmatprep.subr.mxu0 0.0
    %497 = vmatpush1.msra.mxu0 0.0
    %498 = vmatprep.subr.mxu0 0.0
    %499 = vmatpush1.msra.mxu0 0.0
    %500 = vmatprep.subr.mxu0 0.0
    %501 = vmatpush1.msra.mxu0 0.0
    %502 = vmatprep.subr.mxu0 0.0
    %503 = vmatpush1.msra.mxu0 0.0
    %504 = vmatprep.subr.mxu0 0.0
    %505 = vmatpush1.msra.mxu0 0.0
    %506 = vmatprep.subr.mxu0 0.0
    %507 = vmatpush1.msra.mxu0 0.0
    %508 = vmatprep.subr.mxu0 0.0
    %509 = vmatpush1.msra.mxu0 0.0
    %510 = vmatprep.subr.mxu0 0.0
    %511 = vmatpush1.msra.mxu0 0.0
    %512 = vmatprep.subr.mxu0 0.0
    %513 = vmatpush1.msra.mxu0 0.0
    %514 = vmatprep.subr.mxu0 0.0
    %515 = vmatpush1.msra.mxu0 0.0
    %516 = vmatprep.subr.mxu0 0.0
    %517 = vmatpush1.msra.mxu0 0.0
    %518 = vmatprep.subr.mxu0 0.0
    %519 = vmatpush1.msra.mxu0 0.0
    %520 = vmatprep.subr.mxu0 0.0
    %521 = vmatpush1.msra.mxu0 0.0
    %522 = vmatprep.subr.mxu0 0.0
    %523 = vmatpush1.msra.mxu0 0.0
    %524 = vmatprep.mubr.f32.mxu0 0.0
    %525 = vmatmul.mubr.f32.gmra.mrb[0].mxu0 %v458
    %v526 = vpop.f32.mrb[0].mxu0
    %v527 = vadd.f32 %v454, %v526
    %v528 = vpop.f32.mrb[0].mxu0
    %529 = vdwg.mxu0
    %v530 = vmax.f32 %v527, 0.0
    %v531 = vld [vmem:[%s11] sm:$0xff]
    %v532 = vld [vmem:[%s11 + $0x8] sm:$0xff]
    %v533 = vld [vmem:[%s11 + $0x10] sm:$0xff]
    %v534 = vld [vmem:[%s11 + $0x18] sm:$0xff]
    %v535 = vld [vmem:[%s11 + $0x20] sm:$0xff]
    %v536 = vld [vmem:[%s11 + $0x28] sm:$0xff]
    %v537 = vld [vmem:[%s11 + $0x30] sm:$0xff]
    %v538 = vld [vmem:[%s11 + $0x38] sm:$0xff]
    %v539 = vld [vmem:[%s12] sm:$0x1]
    %v541 = vlaneseq
    %v542 = vshrl.u32 %v541, 7
    %v543 = vsub.s32 0, %v542
    %v544 = vrot.slane %v539, %v543
    %v547 = vsel %vm358, %v530, 0
    %549 = vmatprep.subr.mxu0 0.0
    %550 = vmatpush1.msra.mxu0 %v531
    %551 = vmatprep.subr.mxu0 0.0
    %552 = vmatpush1.msra.mxu0 %v532
    %553 = vmatprep.subr.mxu0 0.0
    %554 = vmatpush1.msra.mxu0 %v533
    %555 = vmatprep.subr.mxu0 0.0
    %556 = vmatpush1.msra.mxu0 %v534
    %557 = vmatprep.subr.mxu0 0.0
    %558 = vmatpush1.msra.mxu0 %v535
    %559 = vmatprep.subr.mxu0 0.0
    %560 = vmatpush1.msra.mxu0 %v536
    %561 = vmatprep.subr.mxu0 0.0
    %562 = vmatpush1.msra.mxu0 %v537
    %563 = vmatprep.subr.mxu0 0.0
    %564 = vmatpush1.msra.mxu0 %v538
    %565 = vmatprep.subr.mxu0 0.0
    %566 = vmatpush1.msra.mxu0 0.0
    %567 = vmatprep.subr.mxu0 0.0
    %568 = vmatpush1.msra.mxu0 0.0
    %569 = vmatprep.subr.mxu0 0.0
    %570 = vmatpush1.msra.mxu0 0.0
    %571 = vmatprep.subr.mxu0 0.0
    %572 = vmatpush1.msra.mxu0 0.0
    %573 = vmatprep.subr.mxu0 0.0
    %574 = vmatpush1.msra.mxu0 0.0
    %575 = vmatprep.subr.mxu0 0.0
    %576 = vmatpush1.msra.mxu0 0.0
    %577 = vmatprep.subr.mxu0 0.0
    %578 = vmatpush1.msra.mxu0 0.0
    %579 = vmatprep.subr.mxu0 0.0
    %580 = vmatpush1.msra.mxu0 0.0
    %581 = vmatprep.subr.mxu0 0.0
    %582 = vmatpush1.msra.mxu0 0.0
    %583 = vmatprep.subr.mxu0 0.0
    %584 = vmatpush1.msra.mxu0 0.0
    %585 = vmatprep.subr.mxu0 0.0
    %586 = vmatpush1.msra.mxu0 0.0
    %587 = vmatprep.subr.mxu0 0.0
    %588 = vmatpush1.msra.mxu0 0.0
    %589 = vmatprep.subr.mxu0 0.0
    %590 = vmatpush1.msra.mxu0 0.0
    %591 = vmatprep.subr.mxu0 0.0
    %592 = vmatpush1.msra.mxu0 0.0
    %593 = vmatprep.subr.mxu0 0.0
    %594 = vmatpush1.msra.mxu0 0.0
    %595 = vmatprep.subr.mxu0 0.0
    %596 = vmatpush1.msra.mxu0 0.0
    %597 = vmatprep.subr.mxu0 0.0
    %598 = vmatpush1.msra.mxu0 0.0
    %599 = vmatprep.subr.mxu0 0.0
    %600 = vmatpush1.msra.mxu0 0.0
    %601 = vmatprep.subr.mxu0 0.0
    %602 = vmatpush1.msra.mxu0 0.0
    %603 = vmatprep.subr.mxu0 0.0
    %604 = vmatpush1.msra.mxu0 0.0
    %605 = vmatprep.subr.mxu0 0.0
    %606 = vmatpush1.msra.mxu0 0.0
    %607 = vmatprep.subr.mxu0 0.0
    %608 = vmatpush1.msra.mxu0 0.0
    %609 = vmatprep.subr.mxu0 0.0
    %610 = vmatpush1.msra.mxu0 0.0
    %611 = vmatprep.subr.mxu0 0.0
    %612 = vmatpush1.msra.mxu0 0.0
    %613 = vmatprep.mubr.f32.mxu0 0.0
    %614 = vmatmul.mubr.f32.gmra.mrb[0].mxu0 %v547
    %v615 = vpop.f32.mrb[0].mxu0
    %v616 = vadd.f32 %v544, %v615
    %v617 = vpop.f32.mrb[0].mxu0
    %618 = vdwg.mxu0
    %v619 = vmax.f32 %v616, 0.0
    %v620 = vld [vmem:[#allocation11] sm:$0xff]
    %v621 = vld [vmem:[#allocation11 + $0x8] sm:$0xff]
    %v622 = vld [vmem:[#allocation11 + $0x10] sm:$0xff]
    %v623 = vld [vmem:[#allocation11 + $0x18] sm:$0xff]
    %v624 = vld [vmem:[#allocation11 + $0x20] sm:$0xff]
    %v625 = vld [vmem:[#allocation11 + $0x28] sm:$0xff]
    %v626 = vld [vmem:[#allocation11 + $0x30] sm:$0xff]
    %v627 = vld [vmem:[#allocation11 + $0x38] sm:$0xff]
    %v628 = vld [vmem:[#allocation11 + $0x40] sm:$0xff]
    %v629 = vld [vmem:[#allocation11 + $0x48] sm:$0xff]
    %v630 = vld [vmem:[#allocation11 + $0x50] sm:$0xff]
    %v631 = vld [vmem:[#allocation11 + $0x58] sm:$0xff]
    %v632 = vld [vmem:[#allocation11 + $0x60] sm:$0xff]
    %v633 = vld [vmem:[#allocation11 + $0x68] sm:$0xff]
    %v634 = vld [vmem:[#allocation11 + $0x70] sm:$0xff]
    %v635 = vld [vmem:[#allocation11 + $0x78] sm:$0xff]
    %v636 = vld [vmem:[#allocation11 + $0x80] sm:$0xff]
    %v637 = vld [vmem:[#allocation11 + $0x88] sm:$0xff]
    %v638 = vld [vmem:[#allocation11 + $0x90] sm:$0xff]
    %v639 = vld [vmem:[#allocation11 + $0x98] sm:$0xff]
    %v640 = vld [vmem:[#allocation11 + $0xa0] sm:$0xff]
    %v641 = vld [vmem:[#allocation11 + $0xa8] sm:$0xff]
    %v642 = vld [vmem:[#allocation11 + $0xb0] sm:$0xff]
    %v643 = vld [vmem:[#allocation11 + $0xb8] sm:$0xff]
    %v644 = vld [vmem:[#allocation11 + $0xc0] sm:$0xff]
    %v645 = vld [vmem:[#allocation11 + $0xc8] sm:$0xff]
    %v646 = vld [vmem:[#allocation11 + $0xd0] sm:$0xff]
    %v647 = vld [vmem:[#allocation11 + $0xd8] sm:$0xff]
    %v648 = vld [vmem:[#allocation11 + $0xe0] sm:$0xff]
    %v649 = vld [vmem:[#allocation11 + $0xe8] sm:$0xff]
    %v650 = vld [vmem:[#allocation11 + $0xf0] sm:$0xff]
    %v651 = vld [vmem:[#allocation11 + $0xf8] sm:$0xff]
    %v652 = vld [vmem:[#allocation11 + $0x100] sm:$0xff]
    %v653 = vld [vmem:[#allocation11 + $0x108] sm:$0xff]
    %v654 = vld [vmem:[#allocation11 + $0x110] sm:$0xff]
    %v655 = vld [vmem:[#allocation11 + $0x118] sm:$0xff]
    %v656 = vld [vmem:[#allocation11 + $0x120] sm:$0xff]
    %v657 = vld [vmem:[#allocation11 + $0x128] sm:$0xff]
    %v658 = vld [vmem:[#allocation11 + $0x130] sm:$0xff]
    %v659 = vld [vmem:[#allocation11 + $0x138] sm:$0xff]
    %v660 = vld [vmem:[#allocation11 + $0x140] sm:$0xff]
    %v661 = vld [vmem:[#allocation11 + $0x148] sm:$0xff]
    %v662 = vld [vmem:[#allocation11 + $0x150] sm:$0xff]
    %v663 = vld [vmem:[#allocation11 + $0x158] sm:$0xff]
    %v664 = vld [vmem:[#allocation11 + $0x160] sm:$0xff]
    %v665 = vld [vmem:[#allocation11 + $0x168] sm:$0xff]
    %v666 = vld [vmem:[#allocation11 + $0x170] sm:$0xff]
    %v667 = vld [vmem:[#allocation11 + $0x178] sm:$0xff]
    %v668 = vld [vmem:[#allocation11 + $0x180] sm:$0xff]
    %v669 = vld [vmem:[#allocation11 + $0x188] sm:$0xff]
    %v670 = vld [vmem:[#allocation11 + $0x190] sm:$0xff]
    %v671 = vld [vmem:[#allocation11 + $0x198] sm:$0xff]
    %v672 = vld [vmem:[#allocation11 + $0x1a0] sm:$0xff]
    %v673 = vld [vmem:[#allocation11 + $0x1a8] sm:$0xff]
    %v674 = vld [vmem:[#allocation11 + $0x1b0] sm:$0xff]
    %v675 = vld [vmem:[#allocation11 + $0x1b8] sm:$0xff]
    %v676 = vld [vmem:[#allocation11 + $0x1c0] sm:$0xff]
    %v677 = vld [vmem:[#allocation11 + $0x1c8] sm:$0xff]
    %v678 = vld [vmem:[#allocation11 + $0x1d0] sm:$0xff]
    %v679 = vld [vmem:[#allocation11 + $0x1d8] sm:$0xff]
    %v680 = vld [vmem:[#allocation11 + $0x1e0] sm:$0xff]
    %v681 = vld [vmem:[#allocation11 + $0x1e8] sm:$0xff]
    %v682 = vld [vmem:[#allocation11 + $0x1f0] sm:$0xff]
    %v683 = vld [vmem:[#allocation11 + $0x1f8] sm:$0xff]
    %v684 = vld [vmem:[#allocation11 + $0x200] sm:$0xff]
    %v685 = vld [vmem:[#allocation11 + $0x208] sm:$0xff]
    %v686 = vld [vmem:[#allocation11 + $0x210] sm:$0xff]
    %v687 = vld [vmem:[#allocation11 + $0x218] sm:$0xff]
    %v688 = vld [vmem:[#allocation11 + $0x220] sm:$0xff]
    %v689 = vld [vmem:[#allocation11 + $0x228] sm:$0xff]
    %v690 = vld [vmem:[#allocation11 + $0x230] sm:$0xff]
    %v691 = vld [vmem:[#allocation11 + $0x238] sm:$0xff]
    %v692 = vld [vmem:[#allocation11 + $0x240] sm:$0xff]
    %v693 = vld [vmem:[#allocation11 + $0x248] sm:$0xff]
    %v694 = vld [vmem:[#allocation11 + $0x250] sm:$0xff]
    %v695 = vld [vmem:[#allocation11 + $0x258] sm:$0xff]
    %v696 = vld [vmem:[#allocation11 + $0x260] sm:$0xff]
    %v697 = vld [vmem:[#allocation11 + $0x268] sm:$0xff]
    %v698 = vld [vmem:[#allocation11 + $0x270] sm:$0xff]
    %v699 = vld [vmem:[#allocation11 + $0x278] sm:$0xff]
    %v700 = vld [vmem:[#allocation11 + $0x280] sm:$0xff]
    %v701 = vld [vmem:[#allocation11 + $0x288] sm:$0xff]
    %v702 = vld [vmem:[#allocation11 + $0x290] sm:$0xff]
    %v703 = vld [vmem:[#allocation11 + $0x298] sm:$0xff]
    %v704 = vld [vmem:[#allocation11 + $0x2a0] sm:$0xff]
    %v705 = vld [vmem:[#allocation11 + $0x2a8] sm:$0xff]
    %v706 = vld [vmem:[#allocation11 + $0x2b0] sm:$0xff]
    %v707 = vld [vmem:[#allocation11 + $0x2b8] sm:$0xff]
    %v708 = vld [vmem:[#allocation11 + $0x2c0] sm:$0xff]
    %v709 = vld [vmem:[#allocation11 + $0x2c8] sm:$0xff]
    %v710 = vld [vmem:[#allocation11 + $0x2d0] sm:$0xff]
    %v711 = vld [vmem:[#allocation11 + $0x2d8] sm:$0xff]
    %v712 = vld [vmem:[#allocation11 + $0x2e0] sm:$0xff]
    %v713 = vld [vmem:[#allocation11 + $0x2e8] sm:$0xff]
    %v714 = vld [vmem:[#allocation11 + $0x2f0] sm:$0xff]
    %v715 = vld [vmem:[#allocation11 + $0x2f8] sm:$0xff]
    %v716 = vld [vmem:[%s14] sm:$0x3f]
    %v718 = vlaneseq
    %v719 = vshrl.u32 %v718, 7
    %v720 = vsub.s32 0, %v719
    %v721 = vrot.slane %v716, %v720
    %v722 = vlaneseq
    %v723 = vshrl.u32 %v722, 7
    %v724 = vsub.s32 1, %v723
    %v725 = vrot.slane %v716, %v724
    %v726 = vlaneseq
    %v727 = vshrl.u32 %v726, 7
    %v728 = vsub.s32 2, %v727
    %v729 = vrot.slane %v716, %v728
    %v730 = vlaneseq
    %v731 = vshrl.u32 %v730, 7
    %v732 = vsub.s32 3, %v731
    %v733 = vrot.slane %v716, %v732
    %v734 = vlaneseq
    %v735 = vshrl.u32 %v734, 7
    %v736 = vsub.s32 4, %v735
    %v737 = vrot.slane %v716, %v736
    %v738 = vlaneseq
    %v739 = vshrl.u32 %v738, 7
    %v740 = vsub.s32 5, %v739
    %v741 = vrot.slane %v716, %v740
    %748 = vmatprep.subr.mxu0 %v621
    %749 = vmatpush1.msra.mxu0 %v620
    %750 = vmatprep.subr.mxu0 %v627
    %751 = vmatpush1.msra.mxu0 %v626
    %752 = vmatprep.subr.mxu0 %v633
    %753 = vmatpush1.msra.mxu0 %v632
    %754 = vmatprep.subr.mxu0 %v639
    %755 = vmatpush1.msra.mxu0 %v638
    %756 = vmatprep.subr.mxu0 %v645
    %757 = vmatpush1.msra.mxu0 %v644
    %758 = vmatprep.subr.mxu0 %v651
    %759 = vmatpush1.msra.mxu0 %v650
    %760 = vmatprep.subr.mxu0 %v657
    %761 = vmatpush1.msra.mxu0 %v656
    %762 = vmatprep.subr.mxu0 %v663
    %763 = vmatpush1.msra.mxu0 %v662
    %764 = vmatprep.subr.mxu0 %v669
    %765 = vmatpush1.msra.mxu0 %v668
    %766 = vmatprep.subr.mxu0 %v675
    %767 = vmatpush1.msra.mxu0 %v674
    %768 = vmatprep.subr.mxu0 %v681
    %769 = vmatpush1.msra.mxu0 %v680
    %770 = vmatprep.subr.mxu0 %v687
    %771 = vmatpush1.msra.mxu0 %v686
    %772 = vmatprep.subr.mxu0 %v693
    %773 = vmatpush1.msra.mxu0 %v692
    %774 = vmatprep.subr.mxu0 %v699
    %775 = vmatpush1.msra.mxu0 %v698
    %776 = vmatprep.subr.mxu0 %v705
    %777 = vmatpush1.msra.mxu0 %v704
    %778 = vmatprep.subr.mxu0 %v711
    %779 = vmatpush1.msra.mxu0 %v710
    %780 = vmatprep.subr.mxu0 0.0
    %781 = vmatpush1.msra.mxu0 0.0
    %782 = vmatprep.subr.mxu0 0.0
    %783 = vmatpush1.msra.mxu0 0.0
    %784 = vmatprep.subr.mxu0 0.0
    %785 = vmatpush1.msra.mxu0 0.0
    %786 = vmatprep.subr.mxu0 0.0
    %787 = vmatpush1.msra.mxu0 0.0
    %788 = vmatprep.subr.mxu0 0.0
    %789 = vmatpush1.msra.mxu0 0.0
    %790 = vmatprep.subr.mxu0 0.0
    %791 = vmatpush1.msra.mxu0 0.0
    %792 = vmatprep.subr.mxu0 0.0
    %793 = vmatpush1.msra.mxu0 0.0
    %794 = vmatprep.subr.mxu0 0.0
    %795 = vmatpush1.msra.mxu0 0.0
    %796 = vmatprep.subr.mxu0 0.0
    %797 = vmatpush1.msra.mxu0 0.0
    %798 = vmatprep.subr.mxu0 0.0
    %799 = vmatpush1.msra.mxu0 0.0
    %800 = vmatprep.subr.mxu0 0.0
    %801 = vmatpush1.msra.mxu0 0.0
    %802 = vmatprep.subr.mxu0 0.0
    %803 = vmatpush1.msra.mxu0 0.0
    %804 = vmatprep.subr.mxu0 0.0
    %805 = vmatpush1.msra.mxu0 0.0
    %806 = vmatprep.subr.mxu0 0.0
    %807 = vmatpush1.msra.mxu0 0.0
    %808 = vmatprep.subr.mxu0 0.0
    %809 = vmatpush1.msra.mxu0 0.0
    %810 = vmatprep.subr.mxu0 0.0
    %811 = vmatpush1.msra.mxu0 0.0
    %812 = vmatprep.mubr.f32.mxu0 0.0
    %813 = vmatmul.mubr.f32.gmra.mrb[0].mxu0 %v619
    %v814 = vpop.f32.mrb[0].mxu0
    %v815 = vadd.f32 %v721, %v814
    %v816 = vpop.f32.mrb[0].mxu0
    %v817 = vadd.f32 %v725, %v816
    %818 = vdwg.mxu0
    %819 = vmatprep.subr.mxu0 %v623
    %820 = vmatpush1.msra.mxu0 %v622
    %821 = vmatprep.subr.mxu0 %v629
    %822 = vmatpush1.msra.mxu0 %v628
    %823 = vmatprep.subr.mxu0 %v635
    %824 = vmatpush1.msra.mxu0 %v634
    %825 = vmatprep.subr.mxu0 %v641
    %826 = vmatpush1.msra.mxu0 %v640
    %827 = vmatprep.subr.mxu0 %v647
    %828 = vmatpush1.msra.mxu0 %v646
    %829 = vmatprep.subr.mxu0 %v653
    %830 = vmatpush1.msra.mxu0 %v652
    %831 = vmatprep.subr.mxu0 %v659
    %832 = vmatpush1.msra.mxu0 %v658
    %833 = vmatprep.subr.mxu0 %v665
    %834 = vmatpush1.msra.mxu0 %v664
    %835 = vmatprep.subr.mxu0 %v671
    %836 = vmatpush1.msra.mxu0 %v670
    %837 = vmatprep.subr.mxu0 %v677
    %838 = vmatpush1.msra.mxu0 %v676
    %839 = vmatprep.subr.mxu0 %v683
    %840 = vmatpush1.msra.mxu0 %v682
    %841 = vmatprep.subr.mxu0 %v689
    %842 = vmatpush1.msra.mxu0 %v688
    %843 = vmatprep.subr.mxu0 %v695
    %844 = vmatpush1.msra.mxu0 %v694
    %845 = vmatprep.subr.mxu0 %v701
    %846 = vmatpush1.msra.mxu0 %v700
    %847 = vmatprep.subr.mxu0 %v707
    %848 = vmatpush1.msra.mxu0 %v706
    %849 = vmatprep.subr.mxu0 %v713
    %850 = vmatpush1.msra.mxu0 %v712
    %851 = vmatprep.subr.mxu0 0.0
    %852 = vmatpush1.msra.mxu0 0.0
    %853 = vmatprep.subr.mxu0 0.0
    %854 = vmatpush1.msra.mxu0 0.0
    %855 = vmatprep.subr.mxu0 0.0
    %856 = vmatpush1.msra.mxu0 0.0
    %857 = vmatprep.subr.mxu0 0.0
    %858 = vmatpush1.msra.mxu0 0.0
    %859 = vmatprep.subr.mxu0 0.0
    %860 = vmatpush1.msra.mxu0 0.0
    %861 = vmatprep.subr.mxu0 0.0
    %862 = vmatpush1.msra.mxu0 0.0
    %863 = vmatprep.subr.mxu0 0.0
    %864 = vmatpush1.msra.mxu0 0.0
    %865 = vmatprep.subr.mxu0 0.0
    %866 = vmatpush1.msra.mxu0 0.0
    %867 = vmatprep.subr.mxu0 0.0
    %868 = vmatpush1.msra.mxu0 0.0
    %869 = vmatprep.subr.mxu0 0.0
    %870 = vmatpush1.msra.mxu0 0.0
    %871 = vmatprep.subr.mxu0 0.0
    %872 = vmatpush1.msra.mxu0 0.0
    %873 = vmatprep.subr.mxu0 0.0
    %874 = vmatpush1.msra.mxu0 0.0
    %875 = vmatprep.subr.mxu0 0.0
    %876 = vmatpush1.msra.mxu0 0.0
    %877 = vmatprep.subr.mxu0 0.0
    %878 = vmatpush1.msra.mxu0 0.0
    %879 = vmatprep.subr.mxu0 0.0
    %880 = vmatpush1.msra.mxu0 0.0
    %881 = vmatprep.subr.mxu0 0.0
    %882 = vmatpush1.msra.mxu0 0.0
    %883 = vmatprep.mubr.f32.mxu0 0.0
    %884 = vmatmul.mubr.f32.gmra.mrb[0].mxu0 %v619
    %v885 = vpop.f32.mrb[0].mxu0
    %v886 = vadd.f32 %v729, %v885
    %v887 = vpop.f32.mrb[0].mxu0
    %v888 = vadd.f32 %v733, %v887
    %889 = vdwg.mxu0
    %890 = vmatprep.subr.mxu0 %v625
    %891 = vmatpush1.msra.mxu0 %v624
    %892 = vmatprep.subr.mxu0 %v631
    %893 = vmatpush1.msra.mxu0 %v630
    %894 = vmatprep.subr.mxu0 %v637
    %895 = vmatpush1.msra.mxu0 %v636
    %896 = vmatprep.subr.mxu0 %v643
    %897 = vmatpush1.msra.mxu0 %v642
    %898 = vmatprep.subr.mxu0 %v649
    %899 = vmatpush1.msra.mxu0 %v648
    %900 = vmatprep.subr.mxu0 %v655
    %901 = vmatpush1.msra.mxu0 %v654
    %902 = vmatprep.subr.mxu0 %v661
    %903 = vmatpush1.msra.mxu0 %v660
    %904 = vmatprep.subr.mxu0 %v667
    %905 = vmatpush1.msra.mxu0 %v666
    %906 = vmatprep.subr.mxu0 %v673
    %907 = vmatpush1.msra.mxu0 %v672
    %908 = vmatprep.subr.mxu0 %v679
    %909 = vmatpush1.msra.mxu0 %v678
    %910 = vmatprep.subr.mxu0 %v685
    %911 = vmatpush1.msra.mxu0 %v684
    %912 = vmatprep.subr.mxu0 %v691
    %913 = vmatpush1.msra.mxu0 %v690
    %914 = vmatprep.subr.mxu0 %v697
    %915 = vmatpush1.msra.mxu0 %v696
    %916 = vmatprep.subr.mxu0 %v703
    %917 = vmatpush1.msra.mxu0 %v702
    %918 = vmatprep.subr.mxu0 %v709
    %919 = vmatpush1.msra.mxu0 %v708
    %920 = vmatprep.subr.mxu0 %v715
    %921 = vmatpush1.msra.mxu0 %v714
    %922 = vmatprep.subr.mxu0 0.0
    %923 = vmatpush1.msra.mxu0 0.0
    %924 = vmatprep.subr.mxu0 0.0
    %925 = vmatpush1.msra.mxu0 0.0
    %926 = vmatprep.subr.mxu0 0.0
    %927 = vmatpush1.msra.mxu0 0.0
    %928 = vmatprep.subr.mxu0 0.0
    %929 = vmatpush1.msra.mxu0 0.0
    %930 = vmatprep.subr.mxu0 0.0
    %931 = vmatpush1.msra.mxu0 0.0
    %932 = vmatprep.subr.mxu0 0.0
    %933 = vmatpush1.msra.mxu0 0.0
    %934 = vmatprep.subr.mxu0 0.0
    %935 = vmatpush1.msra.mxu0 0.0
    %936 = vmatprep.subr.mxu0 0.0
    %937 = vmatpush1.msra.mxu0 0.0
    %938 = vmatprep.subr.mxu0 0.0
    %939 = vmatpush1.msra.mxu0 0.0
    %940 = vmatprep.subr.mxu0 0.0
    %941 = vmatpush1.msra.mxu0 0.0
    %942 = vmatprep.subr.mxu0 0.0
    %943 = vmatpush1.msra.mxu0 0.0
    %944 = vmatprep.subr.mxu0 0.0
    %945 = vmatpush1.msra.mxu0 0.0
    %946 = vmatprep.subr.mxu0 0.0
    %947 = vmatpush1.msra.mxu0 0.0
    %948 = vmatprep.subr.mxu0 0.0
    %949 = vmatpush1.msra.mxu0 0.0
    %950 = vmatprep.subr.mxu0 0.0
    %951 = vmatpush1.msra.mxu0 0.0
    %952 = vmatprep.subr.mxu0 0.0
    %953 = vmatpush1.msra.mxu0 0.0
    %954 = vmatprep.mubr.f32.mxu0 0.0
    %955 = vmatmul.mubr.f32.gmra.mrb[0].mxu0 %v619
    %v956 = vpop.f32.mrb[0].mxu0
    %v957 = vadd.f32 %v737, %v956
    %v958 = vpop.f32.mrb[0].mxu0
    %v959 = vadd.f32 %v741, %v958
    %960 = vdwg.mxu0
    %v961 = vmul.f32 %v815, 1.442695
    %v962 = vpow.pop %v961
    %v963 = vmul.f32 %v817, 1.442695
    %v964 = vpow.pop %v963
    %v965 = vmax.f32 %v962, 1e-05
    %v966 = vmax.f32 %v964, 1e-05
    %v967 = vmin.f32 %v965, 1000000.0
    %v968 = vmin.f32 %v966, 1000000.0
    %969 = vst [vmem:[#allocation14] sm:$0xff] %v967
    %970 = vst [vmem:[#allocation14 + $0x8] sm:$0xff] %v968
    %v971 = vmax.f32 %v886, 0.0
    %v972 = vmax.f32 %v888, 0.0
    %v973 = vand.u32 2147483647, %v886
    %v974 = vand.u32 2147483647, %v888
    %v975 = vsub.f32 0.0, %v973
    %v976 = vsub.f32 0.0, %v974
    %v977 = vmul.f32 %v975, 1.442695
    %v978 = vpow.pop %v977
    %v979 = vmul.f32 %v976, 1.442695
    %v980 = vpow.pop %v979
    %v981 = vadd.f32 %v978, 1.0
    %v982 = vlog2.pop %v981
    %v983 = vmul.f32 %v982, 0.6931472
    %v984 = vmul.f32 -0.5, %v978
    %v985 = vadd.f32 %v984, 1.0
    %v986 = vmul.f32 %v985, %v978
    %v987 = vand.u32 2147483647, %v978
    %vm988 = vcmp.lt.f32.partialorder %v987, 0.0004427343
    %v989 = vsel %vm988, %v986, %v983
    %v990 = vadd.f32 %v980, 1.0
    %v991 = vlog2.pop %v990
    %v992 = vmul.f32 %v991, 0.6931472
    %v993 = vmul.f32 -0.5, %v980
    %v994 = vadd.f32 %v993, 1.0
    %v995 = vmul.f32 %v994, %v980
    %v996 = vand.u32 2147483647, %v980
    %vm997 = vcmp.lt.f32.partialorder %v996, 0.0004427343
    %v998 = vsel %vm997, %v995, %v992
    %v999 = vadd.f32 %v971, %v989
    %v1000 = vadd.f32 %v972, %v998
    %v1001 = vmax.f32 %v999, 0.0001
    %v1002 = vmax.f32 %v1000, 0.0001
    %v1003 = vmin.f32 %v1001, 10000.0
    %v1004 = vmin.f32 %v1002, 10000.0
    %1005 = vst [vmem:[#allocation16] sm:$0xff] %v1003
    %1006 = vst [vmem:[#allocation16 + $0x8] sm:$0xff] %v1004
    %v1007 = vxor.u32 %v957, 2147483648
    %v1008 = vxor.u32 %v959, 2147483648
    %v1009 = vmul.f32 %v1007, 1.442695
    %v1010 = vpow.pop %v1009
    %v1011 = vmul.f32 %v1008, 1.442695
    %v1012 = vpow.pop %v1011
    %v1013 = vadd.f32 %v1010, 1.0
    %v1014 = vadd.f32 %v1012, 1.0
    %v1015 = vrcp.pop %v1013
    %v1016 = vmul.f32 1.0, %v1015
    %v1017 = vrcp.pop %v1014
    %v1018 = vmul.f32 1.0, %v1017
    %1019 = vst [vmem:[#allocation17] sm:$0xff] %v1016
    %1020 = vst [vmem:[#allocation17 + $0x8] sm:$0xff] %v1018
    %v1021 = vmul.f32 %v444, %v444
    %v1022 = vsel %vm456, %v1021, 0.0
    %1023 = vadd.xlane.f32.xlu0 %v1022
    %v1024 = vpop.xlane.xlu0 %1023
    %v1025 = vld [vmem:[%s15] sm:$0xff]
    %v1026 = vld [vmem:[%s15 + $0x8] sm:$0xff]
    %v1027 = vld [vmem:[%s15 + $0x10] sm:$0xff]
    %v1028 = vld [vmem:[%s15 + $0x18] sm:$0xff]
    %v1030 = vsel %vm456, %v444, 0
    %1032 = vmatprep.subr.mxu0 0.0
    %1033 = vmatpush1.msra.mxu0 %v1025
    %1034 = vmatprep.subr.mxu0 0.0
    %1035 = vmatpush1.msra.mxu0 %v1026
    %1036 = vmatprep.subr.mxu0 0.0
    %1037 = vmatpush1.msra.mxu0 %v1027
    %1038 = vmatprep.subr.mxu0 0.0
    %1039 = vmatpush1.msra.mxu0 %v1028
    %1040 = vmatprep.subr.mxu0 0.0
    %1041 = vmatpush1.msra.mxu0 0.0
    %1042 = vmatprep.subr.mxu0 0.0
    %1043 = vmatpush1.msra.mxu0 0.0
    %1044 = vmatprep.subr.mxu0 0.0
    %1045 = vmatpush1.msra.mxu0 0.0
    %1046 = vmatprep.subr.mxu0 0.0
    %1047 = vmatpush1.msra.mxu0 0.0
    %1048 = vmatprep.subr.mxu0 0.0
    %1049 = vmatpush1.msra.mxu0 0.0
    %1050 = vmatprep.subr.mxu0 0.0
    %1051 = vmatpush1.msra.mxu0 0.0
    %1052 = vmatprep.subr.mxu0 0.0
    %1053 = vmatpush1.msra.mxu0 0.0
    %1054 = vmatprep.subr.mxu0 0.0
    %1055 = vmatpush1.msra.mxu0 0.0
    %1056 = vmatprep.subr.mxu0 0.0
    %1057 = vmatpush1.msra.mxu0 0.0
    %1058 = vmatprep.subr.mxu0 0.0
    %1059 = vmatpush1.msra.mxu0 0.0
    %1060 = vmatprep.subr.mxu0 0.0
    %1061 = vmatpush1.msra.mxu0 0.0
    %1062 = vmatprep.subr.mxu0 0.0
    %1063 = vmatpush1.msra.mxu0 0.0
    %1064 = vmatprep.subr.mxu0 0.0
    %1065 = vmatpush1.msra.mxu0 0.0
    %1066 = vmatprep.subr.mxu0 0.0
    %1067 = vmatpush1.msra.mxu0 0.0
    %1068 = vmatprep.subr.mxu0 0.0
    %1069 = vmatpush1.msra.mxu0 0.0
    %1070 = vmatprep.subr.mxu0 0.0
    %1071 = vmatpush1.msra.mxu0 0.0
    %1072 = vmatprep.subr.mxu0 0.0
    %1073 = vmatpush1.msra.mxu0 0.0
    %1074 = vmatprep.subr.mxu0 0.0
    %1075 = vmatpush1.msra.mxu0 0.0
    %1076 = vmatprep.subr.mxu0 0.0
    %1077 = vmatpush1.msra.mxu0 0.0
    %1078 = vmatprep.subr.mxu0 0.0
    %1079 = vmatpush1.msra.mxu0 0.0
    %1080 = vmatprep.subr.mxu0 0.0
    %1081 = vmatpush1.msra.mxu0 0.0
    %1082 = vmatprep.subr.mxu0 0.0
    %1083 = vmatpush1.msra.mxu0 0.0
    %1084 = vmatprep.subr.mxu0 0.0
    %1085 = vmatpush1.msra.mxu0 0.0
    %1086 = vmatprep.subr.mxu0 0.0
    %1087 = vmatpush1.msra.mxu0 0.0
    %1088 = vmatprep.subr.mxu0 0.0
    %1089 = vmatpush1.msra.mxu0 0.0
    %1090 = vmatprep.subr.mxu0 0.0
    %1091 = vmatpush1.msra.mxu0 0.0
    %1092 = vmatprep.subr.mxu0 0.0
    %1093 = vmatpush1.msra.mxu0 0.0
    %1094 = vmatprep.subr.mxu0 0.0
    %1095 = vmatpush1.msra.mxu0 0.0
    %1096 = vmatprep.mubr.f32.mxu0 0.0
    %1097 = vmatmul.mubr.f32.gmra.mrb[0].mxu0 %v1030
    %v1098 = vpop.f32.mrb[0].mxu0
    %v1099 = vadd.f32 0.0, %v1098
    %v1100 = vpop.f32.mrb[0].mxu0
    %1101 = vdwg.mxu0
    %v1102 = vld [vmem:[%s16] sm:$0x1]
    %v1104 = vlaneseq
    %v1105 = vshrl.u32 %v1104, 7
    %v1106 = vsub.s32 0, %v1105
    %v1107 = vrot.slane %v1102, %v1106
    %v1109 = vadd.f32 %v1024, %v1107
    %v1110 = vmul.f32 %v1099, 2.0
    %v1111 = vsub.f32 %v1109, %v1110
    %v1112 = vmax.f32 %v1111, 0.0
    %v1113 = vlaneseq
    %v1114 = vand.u32 %v1113, 127
    %vm1115 = vcmp.lt.s32.totalorder %v1114, 8
    %v1116 = vadd.f32 %v1112, 1.0
    %v1117 = vrcp.pop %v1116
    %v1118 = vmul.f32 1.0, %v1117
    %v1119 = vsel %vm1115, %v1118, 0.0
    %v1120 = vsel %vm358, %v1119, 0.0
    %1121 = vadd.xlane.f32.xlu0 %v1120
    %v1122 = vpop.xlane.xlu0 %1121
    %v1123 = vrcp.pop %v1122
    %v1124 = vmul.f32 %v1119, %v1123
    %1126 = vrot.lane.b32.xlu0 %v1124, 64
    %v1127 = vpop.permute.xlu0 %1126
    %v1129 = vsel %vm358, %v429, %v1127
    %1130 = vst [vmem:[#allocation13] sm:$0xff] %v1129
    // Predicated region
    $region94: #{tpu_custom_call.1} parent=1 // pred_check
      _
    $region95: #{tpu_custom_call.1} parent=1 // pred_check_branch
      %1132 = sbr.rel (0) target = $region97
    $region96: #{tpu_custom_call.1} parent=1 // pred_region
      %s1134 = ssub.s32 128, 128
      %1135 = vsyncadd [#allocation4], %s1134
      %s1137 = sshll.u32 [#allocation13], 4
      %s1138 = int_to_ptr.vmem [resolvable:$true] %s1137
      %1140 = dma.vmem_to_hbm [thread:$0]  %s1138, 128, %s17, [#allocation4]
    $region97: #{tpu_custom_call.1} parent=1 // pred_fallthru
      _
    // Predicated region
    $region98: #{tpu_custom_call.1} parent=1 // pred_check
      _
    $region99: #{tpu_custom_call.1} parent=1 // pred_check_branch
      %1142 = sbr.rel (0) target = $region101
    $region100: #{tpu_custom_call.1} parent=1 // pred_region
      %s1144 = ssub.s32 256, 256
      %1145 = vsyncadd [#allocation15], %s1144
      %s1147 = sshll.u32 [#allocation14], 4
      %s1148 = int_to_ptr.vmem [resolvable:$true] %s1147
      %1150 = dma.vmem_to_hbm [thread:$0]  %s1148, 256, %s18, [#allocation15]
    $region101: #{tpu_custom_call.1} parent=1 // pred_fallthru
      _
    // Predicated region
    $region102: #{tpu_custom_call.1} parent=1 // pred_check
      _
    $region103: #{tpu_custom_call.1} parent=1 // pred_check_branch
      %1152 = sbr.rel (0) target = $region105
    $region104: #{tpu_custom_call.1} parent=1 // pred_region
      %s1154 = ssub.s32 256, 256
      %1155 = vsyncadd [#allocation15], %s1154
      %s1157 = sshll.u32 [#allocation16], 4
      %s1158 = int_to_ptr.vmem [resolvable:$true] %s1157
      %1160 = dma.vmem_to_hbm [thread:$0]  %s1158, 256, %s19, [#allocation15]
    $region105: #{tpu_custom_call.1} parent=1 // pred_fallthru
      _
    // Predicated region
    $region106: #{tpu_custom_call.1} parent=1 // pred_check
      _
    $region107: #{tpu_custom_call.1} parent=1 // pred_check_branch
      %1162 = sbr.rel (0) target = $region109
    $region108: #{tpu_custom_call.1} parent=1 // pred_region
      %s1164 = ssub.s32 256, 256
      %1165 = vsyncadd [#allocation18], %s1164
      %s1167 = sshll.u32 [#allocation17], 4
      %s1168 = int_to_ptr.vmem [resolvable:$true] %s1167
      %1170 = dma.vmem_to_hbm [thread:$0]  %s1168, 256, %s20, [#allocation18]
    $region109: #{tpu_custom_call.1} parent=1 // pred_fallthru
      _
    // Predicated region
    $region110: #{tpu_custom_call.1} parent=1 // pred_check
      _
    $region111: #{tpu_custom_call.1} parent=1 // pred_check_branch
      %1172 = sbr.rel (0) target = $region113
    $region112: #{tpu_custom_call.1} parent=1 // pred_region
      %1173 = dma.done [#allocation4], 128
    $region113: #{tpu_custom_call.1} parent=1 // pred_fallthru
      _
    // Predicated region
    $region114: #{tpu_custom_call.1} parent=1 // pred_check
      _
    $region115: #{tpu_custom_call.1} parent=1 // pred_check_branch
      %1175 = sbr.rel (0) target = $region117
    $region116: #{tpu_custom_call.1} parent=1 // pred_region
      %1176 = dma.done [#allocation15], 256
    $region117: #{tpu_custom_call.1} parent=1 // pred_fallthru
      _
    // Predicated region
    $region118: #{tpu_custom_call.1} parent=1 // pred_check
      _
    $region119: #{tpu_custom_call.1} parent=1 // pred_check_branch
      %1178 = sbr.rel (0) target = $region121
    $region120: #{tpu_custom_call.1} parent=1 // pred_region
      %1179 = dma.done [#allocation15], 256
    $region121: #{tpu_custom_call.1} parent=1 // pred_fallthru
      _
    // Predicated region
    $region122: #{tpu_custom_call.1} parent=1 // pred_check
      _
    $region123: #{tpu_custom_call.1} parent=1 // pred_check_branch
      %1181 = sbr.rel (0) target = $region125
    $region124: #{tpu_custom_call.1} parent=1 // pred_region
      %1182 = dma.done [#allocation18], 256
    $region125: #{tpu_custom_call.1} parent=1 // pred_fallthru
      _
    %1183 = vsyncpa [#allocation3], 1
    %1184 = vsyncpa [#allocation6], 1
    %1185 = vsyncpa [#allocation9], 1
    %1186 = vsyncpa [#allocation12], 1
    %1187 = vsyncpa [#allocation4], 1
    %1188 = vsyncpa [#allocation15], 1
    %1189 = vsyncpa [#allocation18], 1

</llo_original>
